<compile_context>
chip_gen: v7x
topology: tpu7x:2x2x1
jax: 0.10.0
libtpu: 0.0.40
codegen_flags: <defaults>
</compile_context>

<pallas_src>
import jax
import jax.numpy as jnp
from jax.experimental import pallas as pl
from jax.experimental.pallas import tpu as pltpu

HIDDEN = 768        # BERT-base hidden width (fixed by nn.Linear(768, 2))
NUM_CLASSES = 2
C_PAD = 128         # lane-dense packed output width
ALPHA_OFF = 64      # alpha occupies lanes [64, 128); logits occupy lanes [0, 64)
TB_MAX = 1024       # max batch-tile rows per grid step (amortize ~0.35us/step)


def _round_up(x, m):
    return (x + m - 1) // m * m


def _softplus(x):
    # Match torch.nn.functional.softplus(beta=1, threshold=20)
    return jnp.where(x > 20.0, x, jnp.log1p(jnp.exp(x)))


def _pooler_cls_head_kernel(x_ref, wp_ref, bp_ref, wc_ref, bc_ref, out_ref):
    # x_ref:   (TB, H)     bf16 [CLS] last-hidden tile (streamed per grid step)
    # wp_ref:  (H, H)      bf16 pooler weight, transposed (resident across steps)
    # bp_ref:  (1, H)      f32  pooler bias
    # wc_ref:  (H, C_PAD)  bf16 cls weight^T, replicated into lanes [0:2] and [64:66]
    # bc_ref:  (1, C_PAD)  f32  cls bias, same replication
    # out_ref: (TB, C_PAD) f32  packed output: logits in lanes [0,64), alpha in [64,128)

    # BERT pooler: tanh(x @ Wp^T + bp)  -- bf16 MXU matmul, f32 accumulation/epilogue.
    pooled = jnp.tanh(
        jnp.dot(x_ref[...], wp_ref[...], preferred_element_type=jnp.float32)
        + bp_ref[...]
    )

    # Classification head, fused on the already-resident pooled tile.
    # Dropout(p=0.1) is identity in eval mode.
    logits = jnp.dot(pooled.astype(jnp.bfloat16), wc_ref[...],
                     preferred_element_type=jnp.float32) + bc_ref[...]

    # Pack logits and alpha = softplus(logits) + 1 into one lane-dense (TB, 128) store.
    lane = jax.lax.broadcasted_iota(jnp.int32, logits.shape, 1)
    packed = jnp.where(lane < ALPHA_OFF, logits, _softplus(logits) + 1.0)
    out_ref[...] = packed.astype(out_ref.dtype)


@jax.jit
def sentence_pair_classifier_head(cls_hidden, pooler_w, pooler_b, cls_w, cls_b):
    """Fused BERT-pooler + classification head.

    cls_hidden: (B, 768) f32  -- [CLS] token last hidden state
    pooler_w:   (768, 768) f32 -- PyTorch Linear weight layout (out, in)
    pooler_b:   (768,)     f32
    cls_w:      (2, 768)   f32 -- PyTorch Linear weight layout
    cls_b:      (2,)       f32
    returns (logits, alpha), each (B, 2) f32
    """
    B, H = cls_hidden.shape
    C = cls_w.shape[0]

    # --- batch tiling (static under jit) -----------------------------------
    b8 = _round_up(B, 8)
    if b8 <= 8:
        n_steps = 1
    else:
        # >= 2 (even) grid steps so both v7x TensorCores get work; tile bounded by
        # TB_MAX; padding stays within a handful of rows for any B.
        n_steps = max(2, pl.cdiv(b8, TB_MAX))
        n_steps = _round_up(n_steps, 2)
    tb = _round_up(pl.cdiv(b8, n_steps), 8)
    b_pad = n_steps * tb

    x = cls_hidden
    if b_pad != B:
        x = jnp.pad(x, ((0, b_pad - B), (0, 0)))
    x = x.astype(jnp.bfloat16)  # bf16 MXU operand; halves per-tile input DMA

    # --- parameter prep (once, in the wrapper; no per-step casts in the body) ---
    wp_t = jnp.transpose(pooler_w).astype(jnp.bfloat16)             # (H, H)
    bp = pooler_b.reshape(1, H).astype(jnp.float32)                 # (1, H)
    wc_t = jnp.transpose(cls_w).astype(jnp.float32)                 # (H, C)
    wc_pad = (jnp.zeros((H, C_PAD), jnp.float32)
              .at[:, :C].set(wc_t)
              .at[:, ALPHA_OFF:ALPHA_OFF + C].set(wc_t)).astype(jnp.bfloat16)
    bc_pad = (jnp.zeros((1, C_PAD), jnp.float32)
              .at[0, :C].set(cls_b.astype(jnp.float32))
              .at[0, ALPHA_OFF:ALPHA_OFF + C].set(cls_b.astype(jnp.float32)))

    cost = pl.CostEstimate(
        flops=2 * b_pad * H * H + 2 * b_pad * H * C_PAD,
        transcendentals=b_pad * H + b_pad * C_PAD,
        bytes_accessed=(b_pad * H * 2 + H * H * 2 + H * C_PAD * 2   # bf16 reads
                        + H * 4 + C_PAD * 4                         # f32 biases
                        + b_pad * C_PAD * 4),                       # f32 packed output
    )

    out = pl.pallas_call(
        _pooler_cls_head_kernel,
        out_shape=jax.ShapeDtypeStruct((b_pad, C_PAD), jnp.float32),
        grid=(n_steps,),
        in_specs=[
            pl.BlockSpec((tb, H), lambda i: (i, 0)),       # streamed batch tile
            pl.BlockSpec((H, H), lambda i: (0, 0)),        # resident pooler weight
            pl.BlockSpec((1, H), lambda i: (0, 0)),        # resident pooler bias
            pl.BlockSpec((H, C_PAD), lambda i: (0, 0)),    # resident cls weight (packed)
            pl.BlockSpec((1, C_PAD), lambda i: (0, 0)),    # resident cls bias (packed)
        ],
        out_specs=pl.BlockSpec((tb, C_PAD), lambda i: (i, 0)),  # lane-dense store
        compiler_params=pltpu.CompilerParams(
            dimension_semantics=("parallel",),
        ),
        cost_estimate=cost,
    )(x, wp_t, bp, wc_pad, bc_pad)

    logits = out[:B, :C]
    alpha = out[:B, ALPHA_OFF:ALPHA_OFF + C]
    return logits, alpha


def reference_forward(cls_hidden, pooler_w, pooler_b, cls_w, cls_b):
    pooled = jnp.tanh(cls_hidden @ pooler_w.T + pooler_b)
    logits = pooled @ cls_w.T + cls_b
    alpha = jnp.where(logits > 20.0, logits, jnp.log1p(jnp.exp(logits))) + 1.0
    return logits, alpha


if __name__ == "__main__":
    key = jax.random.PRNGKey(0)
    k_x, k_wp, k_bp, k_wc, k_bc = jax.random.split(key, 5)

    B = 8  # small batch; hidden width fixed at 768 by the module
    cls_hidden = jax.random.normal(k_x, (B, HIDDEN), dtype=jnp.float32)

    # Deterministic synthetic parameters matching nn.Linear shapes.
    pooler_w = jax.random.normal(k_wp, (HIDDEN, HIDDEN), dtype=jnp.float32) * 0.02
    pooler_b = jax.random.normal(k_bp, (HIDDEN,), dtype=jnp.float32) * 0.02
    cls_w = jax.random.normal(k_wc, (NUM_CLASSES, HIDDEN), dtype=jnp.float32) * 0.02
    cls_b = jax.random.normal(k_bc, (NUM_CLASSES,), dtype=jnp.float32) * 0.02

    logits, alpha = sentence_pair_classifier_head(
        cls_hidden, pooler_w, pooler_b, cls_w, cls_b)
    logits, alpha = jax.block_until_ready((logits, alpha))

    ref_logits, ref_alpha = reference_forward(
        cls_hidden, pooler_w, pooler_b, cls_w, cls_b)

    assert logits.shape == (B, NUM_CLASSES) and alpha.shape == (B, NUM_CLASSES)
    # bf16 MXU operands with f32 accumulation over K=768 -> ~1e-2 relative error.
    assert jnp.allclose(logits, ref_logits, atol=2e-2, rtol=2e-2)
    assert jnp.allclose(alpha, ref_alpha, atol=2e-2, rtol=2e-2)

    print("KERNEL_OK")
</pallas_src>

<mosaic_0001>
module attributes {stable_mosaic.version = 11 : i64} {
  func.func @_pooler_cls_head_kernel(%arg0: i32, %arg1: memref<8x768xbf16, #tpu.memory_space<vmem>>, %arg2: memref<768x768xbf16, #tpu.memory_space<vmem>>, %arg3: memref<1x768xf32, #tpu.memory_space<vmem>>, %arg4: memref<768x128xbf16, #tpu.memory_space<vmem>>, %arg5: memref<1x128xf32, #tpu.memory_space<vmem>>, %arg6: memref<8x128xf32, #tpu.memory_space<vmem>>) attributes {dimension_semantics = [#tpu.dimension_semantics<parallel>], iteration_bounds = array<i64: 1>, scalar_prefetch = 0 : i64, scratch_operands = 0 : i64, tpu.core_type = #tpu.core_type<tc>, window_params = [{transform_indices = @transform_0, window_bounds = array<i64: 8, 768>}, {pipeline_mode = #tpu.pipeline_mode<synchronous>, transform_indices = @transform_1, window_bounds = array<i64: 768, 768>}, {pipeline_mode = #tpu.pipeline_mode<synchronous>, transform_indices = @transform_2, window_bounds = array<i64: 1, 768>}, {pipeline_mode = #tpu.pipeline_mode<synchronous>, transform_indices = @transform_3, window_bounds = array<i64: 768, 128>}, {pipeline_mode = #tpu.pipeline_mode<synchronous>, transform_indices = @transform_4, window_bounds = array<i64: 1, 128>}, {transform_indices = @transform_5, window_bounds = array<i64: 8, 128>}]} {
    %c0 = arith.constant 0 : index
    %c0_0 = arith.constant 0 : index
    %0 = vector.load %arg1[%c0, %c0_0] : memref<8x768xbf16, #tpu.memory_space<vmem>>, vector<8x768xbf16>
    %c0_1 = arith.constant 0 : index
    %c0_2 = arith.constant 0 : index
    %1 = vector.load %arg2[%c0_1, %c0_2] : memref<768x768xbf16, #tpu.memory_space<vmem>>, vector<768x768xbf16>
    %cst = arith.constant dense<0.000000e+00> : vector<8x768xf32>
    %2 = tpu.matmul %0, %1, %cst {dimension_numbers = #tpu.dot_dimension_numbers<[1], [0], [0], [1], [0, 0, 1, 1], [], []>} : vector<8x768xbf16>, vector<768x768xbf16>, vector<8x768xf32> -> vector<8x768xf32>
    %c0_3 = arith.constant 0 : index
    %c0_4 = arith.constant 0 : index
    %3 = vector.load %arg3[%c0_3, %c0_4] : memref<1x768xf32, #tpu.memory_space<vmem>>, vector<1x768xf32>
    %4 = vector.broadcast %3 : vector<1x768xf32> to vector<8x768xf32>
    %5 = arith.addf %2, %4 : vector<8x768xf32>
    %6 = math.tanh %5 : vector<8x768xf32>
    %7 = arith.truncf %6 : vector<8x768xf32> to vector<8x768xbf16>
    %c0_5 = arith.constant 0 : index
    %c0_6 = arith.constant 0 : index
    %8 = vector.load %arg4[%c0_5, %c0_6] : memref<768x128xbf16, #tpu.memory_space<vmem>>, vector<768x128xbf16>
    %cst_7 = arith.constant dense<0.000000e+00> : vector<8x128xf32>
    %9 = tpu.matmul %7, %8, %cst_7 {dimension_numbers = #tpu.dot_dimension_numbers<[1], [0], [0], [1], [0, 0, 1, 1], [], []>} : vector<8x768xbf16>, vector<768x128xbf16>, vector<8x128xf32> -> vector<8x128xf32>
    %c0_8 = arith.constant 0 : index
    %c0_9 = arith.constant 0 : index
    %10 = vector.load %arg5[%c0_8, %c0_9] : memref<1x128xf32, #tpu.memory_space<vmem>>, vector<1x128xf32>
    %11 = vector.broadcast %10 : vector<1x128xf32> to vector<8x128xf32>
    %12 = arith.addf %9, %11 : vector<8x128xf32>
    %13 = tpu.iota {dimensions = array<i32: 1>} : vector<8x128xi32>
    %c64_i32 = arith.constant 64 : i32
    %14 = vector.broadcast %c64_i32 : i32 to vector<8x128xi32>
    %15 = arith.cmpi slt, %13, %14 : vector<8x128xi32>
    %cst_10 = arith.constant 2.000000e+01 : f32
    %16 = vector.broadcast %cst_10 : f32 to vector<8x128xf32>
    %17 = arith.cmpf ogt, %12, %16 : vector<8x128xf32>
    %18 = math.exp %12 : vector<8x128xf32>
    %19 = math.log1p %18 : vector<8x128xf32>
    %20 = arith.select %17, %12, %19 : vector<8x128xi1>, vector<8x128xf32>
    %cst_11 = arith.constant 1.000000e+00 : f32
    %21 = vector.broadcast %cst_11 : f32 to vector<8x128xf32>
    %22 = arith.addf %20, %21 : vector<8x128xf32>
    %23 = arith.select %15, %12, %22 : vector<8x128xi1>, vector<8x128xf32>
    %c0_12 = arith.constant 0 : index
    %c0_13 = arith.constant 0 : index
    %24 = vector.load %arg6[%c0_12, %c0_13] : memref<8x128xf32, #tpu.memory_space<vmem>>, vector<8x128xf32>
    tpu.vector_store %arg6[%c0_12, %c0_13], %23 {strides = array<i32>} : memref<8x128xf32, #tpu.memory_space<vmem>>, vector<8x128xf32>,
    return
  }
  func.func @transform_0(%arg0: i32) -> (i32, i32) {
    %c0_i32 = arith.constant 0 : i32
    %c0_i32_0 = arith.constant 0 : i32
    return %arg0, %c0_i32 : i32, i32
  }
  func.func @transform_1(%arg0: i32) -> (i32, i32) {
    %c0_i32 = arith.constant 0 : i32
    %c0_i32_0 = arith.constant 0 : i32
    %c0_i32_1 = arith.constant 0 : i32
    return %c0_i32, %c0_i32_0 : i32, i32
  }
  func.func @transform_2(%arg0: i32) -> (i32, i32) {
    %c0_i32 = arith.constant 0 : i32
    %c0_i32_0 = arith.constant 0 : i32
    %c0_i32_1 = arith.constant 0 : i32
    return %c0_i32, %c0_i32_0 : i32, i32
  }
  func.func @transform_3(%arg0: i32) -> (i32, i32) {
    %c0_i32 = arith.constant 0 : i32
    %c0_i32_0 = arith.constant 0 : i32
    %c0_i32_1 = arith.constant 0 : i32
    return %c0_i32, %c0_i32_0 : i32, i32
  }
  func.func @transform_4(%arg0: i32) -> (i32, i32) {
    %c0_i32 = arith.constant 0 : i32
    %c0_i32_0 = arith.constant 0 : i32
    %c0_i32_1 = arith.constant 0 : i32
    return %c0_i32, %c0_i32_0 : i32, i32
  }
  func.func @transform_5(%arg0: i32) -> (i32, i32) {
    %c0_i32 = arith.constant 0 : i32
    %c0_i32_0 = arith.constant 0 : i32
    return %arg0, %c0_i32 : i32, i32
  }
}

</mosaic_0001>

<llo_original>
// kernel: sentence_pair_classifier_head.1
$region0: #{sentence_pair_classifier_head.1}
  #allocation0 [shape = 'u32[]', space=smem, size = 0x4, offset = 0x4, fixed_abs, tag = 'smem constant byte address 0x4 - core index']
  #allocation1 [shape = 'u32[144,128]{1,0:T(1,128)}', space=vmem, size = 0x12000, scoped, tag = 'internal scratch']
  %s0 = inlined_call_operand.vmem [shape: bf16[8,768], index: 0, kind: input, shape index: {}]
  %s1 = inlined_call_operand.vmem [shape: bf16[768,768], index: 1, kind: input, shape index: {}]
  %s2 = inlined_call_operand.vmem [shape: f32[1,768], index: 2, kind: input, shape index: {}]
  %s3 = inlined_call_operand.vmem [shape: bf16[768,128], index: 3, kind: input, shape index: {}]
  %s4 = inlined_call_operand.vmem [shape: f32[1,128], index: 4, kind: input, shape index: {}]
  %s5 = inlined_call_operand.vmem [shape: f32[8,128], index: 5, kind: output, shape index: {}]
  %s6 = sld [smem:[#allocation0]]
  $region30: #{sentence_pair_classifier_head.1} parent=0
    _
  %s8 = ssub.s32 1, %s6
  %s9 = scalar_select 0, %s8, %s6
  // Predicated region
  $region2: #{sentence_pair_classifier_head.1} parent=0 // pred_check
    _
  $region3: #{sentence_pair_classifier_head.1} parent=0 // pred_check_branch
    %11 = sbr.rel (0) target = $region5
  $region4: #{sentence_pair_classifier_head.1} parent=0 // pred_region
    _
  $region5: #{sentence_pair_classifier_head.1} parent=0 // pred_fallthru
    _
  // Predicated region
  $region6: #{sentence_pair_classifier_head.1} parent=0 // pred_check
    _
  $region7: #{sentence_pair_classifier_head.1} parent=0 // pred_check_branch
    %13 = sbr.rel (0) target = $region9
  $region8: #{sentence_pair_classifier_head.1} parent=0 // pred_region
    _
  $region9: #{sentence_pair_classifier_head.1} parent=0 // pred_fallthru
    _
  // Predicated region
  $region10: #{sentence_pair_classifier_head.1} parent=0 // pred_check
    _
  $region11: #{sentence_pair_classifier_head.1} parent=0 // pred_check_branch
    %15 = sbr.rel (0) target = $region13
  $region12: #{sentence_pair_classifier_head.1} parent=0 // pred_region
    _
  $region13: #{sentence_pair_classifier_head.1} parent=0 // pred_fallthru
    _
  // Predicated region
  $region14: #{sentence_pair_classifier_head.1} parent=0 // pred_check
    _
  $region15: #{sentence_pair_classifier_head.1} parent=0 // pred_check_branch
    %17 = sbr.rel (0) target = $region17
  $region16: #{sentence_pair_classifier_head.1} parent=0 // pred_region
    _
  $region17: #{sentence_pair_classifier_head.1} parent=0 // pred_fallthru
    _
  // Predicated region
  $region18: #{sentence_pair_classifier_head.1} parent=0 // pred_check
    _
  $region19: #{sentence_pair_classifier_head.1} parent=0 // pred_check_branch
    %19 = sbr.rel (0) target = $region21
  $region20: #{sentence_pair_classifier_head.1} parent=0 // pred_region
    _
  $region21: #{sentence_pair_classifier_head.1} parent=0 // pred_fallthru
    _
  %v21 = vld [vmem:[%s0] sm:$0xff]
  %v22 = vld [vmem:[%s0 + $0x8] sm:$0xff]
  %v23 = vld [vmem:[%s0 + $0x10] sm:$0xff]
  %v24 = vld [vmem:[%s1] sm:$0xff]
  %v25 = vld [vmem:[%s1 + $0x8] sm:$0xff]
  %v26 = vld [vmem:[%s1 + $0x10] sm:$0xff]
  %v27 = vld [vmem:[%s1 + $0x18] sm:$0xff]
  %v28 = vld [vmem:[%s1 + $0x20] sm:$0xff]
  %v29 = vld [vmem:[%s1 + $0x28] sm:$0xff]
  %v30 = vld [vmem:[%s1 + $0x30] sm:$0xff]
  %v31 = vld [vmem:[%s1 + $0x38] sm:$0xff]
  %v32 = vld [vmem:[%s1 + $0x40] sm:$0xff]
  %v33 = vld [vmem:[%s1 + $0x48] sm:$0xff]
  %v34 = vld [vmem:[%s1 + $0x50] sm:$0xff]
  %v35 = vld [vmem:[%s1 + $0x58] sm:$0xff]
  %v36 = vld [vmem:[%s1 + $0x60] sm:$0xff]
  %v37 = vld [vmem:[%s1 + $0x68] sm:$0xff]
  %v38 = vld [vmem:[%s1 + $0x70] sm:$0xff]
  %v39 = vld [vmem:[%s1 + $0x78] sm:$0xff]
  %v40 = vld [vmem:[%s1 + $0x80] sm:$0xff]
  %v41 = vld [vmem:[%s1 + $0x88] sm:$0xff]
  %v42 = vld [vmem:[%s1 + $0x90] sm:$0xff]
  %v43 = vld [vmem:[%s1 + $0x98] sm:$0xff]
  %v44 = vld [vmem:[%s1 + $0xa0] sm:$0xff]
  %v45 = vld [vmem:[%s1 + $0xa8] sm:$0xff]
  %v46 = vld [vmem:[%s1 + $0xb0] sm:$0xff]
  %v47 = vld [vmem:[%s1 + $0xb8] sm:$0xff]
  %v48 = vld [vmem:[%s1 + $0xc0] sm:$0xff]
  %v49 = vld [vmem:[%s1 + $0xc8] sm:$0xff]
  %v50 = vld [vmem:[%s1 + $0xd0] sm:$0xff]
  %v51 = vld [vmem:[%s1 + $0xd8] sm:$0xff]
  %v52 = vld [vmem:[%s1 + $0xe0] sm:$0xff]
  %v53 = vld [vmem:[%s1 + $0xe8] sm:$0xff]
  %v54 = vld [vmem:[%s1 + $0xf0] sm:$0xff]
  %v55 = vld [vmem:[%s1 + $0xf8] sm:$0xff]
  %v56 = vld [vmem:[%s1 + $0x100] sm:$0xff]
  %v57 = vld [vmem:[%s1 + $0x108] sm:$0xff]
  %v58 = vld [vmem:[%s1 + $0x110] sm:$0xff]
  %v59 = vld [vmem:[%s1 + $0x118] sm:$0xff]
  %v60 = vld [vmem:[%s1 + $0x120] sm:$0xff]
  %v61 = vld [vmem:[%s1 + $0x128] sm:$0xff]
  %v62 = vld [vmem:[%s1 + $0x130] sm:$0xff]
  %v63 = vld [vmem:[%s1 + $0x138] sm:$0xff]
  %v64 = vld [vmem:[%s1 + $0x140] sm:$0xff]
  %v65 = vld [vmem:[%s1 + $0x148] sm:$0xff]
  %v66 = vld [vmem:[%s1 + $0x150] sm:$0xff]
  %v67 = vld [vmem:[%s1 + $0x158] sm:$0xff]
  %v68 = vld [vmem:[%s1 + $0x160] sm:$0xff]
  %v69 = vld [vmem:[%s1 + $0x168] sm:$0xff]
  %v70 = vld [vmem:[%s1 + $0x170] sm:$0xff]
  %v71 = vld [vmem:[%s1 + $0x178] sm:$0xff]
  %v72 = vld [vmem:[%s1 + $0x180] sm:$0xff]
  %v73 = vld [vmem:[%s1 + $0x188] sm:$0xff]
  %v74 = vld [vmem:[%s1 + $0x190] sm:$0xff]
  %v75 = vld [vmem:[%s1 + $0x198] sm:$0xff]
  %v76 = vld [vmem:[%s1 + $0x1a0] sm:$0xff]
  %v77 = vld [vmem:[%s1 + $0x1a8] sm:$0xff]
  %v78 = vld [vmem:[%s1 + $0x1b0] sm:$0xff]
  %v79 = vld [vmem:[%s1 + $0x1b8] sm:$0xff]
  %v80 = vld [vmem:[%s1 + $0x1c0] sm:$0xff]
  %v81 = vld [vmem:[%s1 + $0x1c8] sm:$0xff]
  %v82 = vld [vmem:[%s1 + $0x1d0] sm:$0xff]
  %v83 = vld [vmem:[%s1 + $0x1d8] sm:$0xff]
  %v84 = vld [vmem:[%s1 + $0x1e0] sm:$0xff]
  %v85 = vld [vmem:[%s1 + $0x1e8] sm:$0xff]
  %v86 = vld [vmem:[%s1 + $0x1f0] sm:$0xff]
  %v87 = vld [vmem:[%s1 + $0x1f8] sm:$0xff]
  %v88 = vld [vmem:[%s1 + $0x200] sm:$0xff]
  %v89 = vld [vmem:[%s1 + $0x208] sm:$0xff]
  %v90 = vld [vmem:[%s1 + $0x210] sm:$0xff]
  %v91 = vld [vmem:[%s1 + $0x218] sm:$0xff]
  %v92 = vld [vmem:[%s1 + $0x220] sm:$0xff]
  %v93 = vld [vmem:[%s1 + $0x228] sm:$0xff]
  %v94 = vld [vmem:[%s1 + $0x230] sm:$0xff]
  %v95 = vld [vmem:[%s1 + $0x238] sm:$0xff]
  %v96 = vld [vmem:[%s1 + $0x240] sm:$0xff]
  %v97 = vld [vmem:[%s1 + $0x248] sm:$0xff]
  %v98 = vld [vmem:[%s1 + $0x250] sm:$0xff]
  %v99 = vld [vmem:[%s1 + $0x258] sm:$0xff]
  %v100 = vld [vmem:[%s1 + $0x260] sm:$0xff]
  %v101 = vld [vmem:[%s1 + $0x268] sm:$0xff]
  %v102 = vld [vmem:[%s1 + $0x270] sm:$0xff]
  %v103 = vld [vmem:[%s1 + $0x278] sm:$0xff]
  %v104 = vld [vmem:[%s1 + $0x280] sm:$0xff]
  %v105 = vld [vmem:[%s1 + $0x288] sm:$0xff]
  %v106 = vld [vmem:[%s1 + $0x290] sm:$0xff]
  %v107 = vld [vmem:[%s1 + $0x298] sm:$0xff]
  %v108 = vld [vmem:[%s1 + $0x2a0] sm:$0xff]
  %v109 = vld [vmem:[%s1 + $0x2a8] sm:$0xff]
  %v110 = vld [vmem:[%s1 + $0x2b0] sm:$0xff]
  %v111 = vld [vmem:[%s1 + $0x2b8] sm:$0xff]
  %v112 = vld [vmem:[%s1 + $0x2c0] sm:$0xff]
  %v113 = vld [vmem:[%s1 + $0x2c8] sm:$0xff]
  %v114 = vld [vmem:[%s1 + $0x2d0] sm:$0xff]
  %v115 = vld [vmem:[%s1 + $0x2d8] sm:$0xff]
  %v116 = vld [vmem:[%s1 + $0x2e0] sm:$0xff]
  %v117 = vld [vmem:[%s1 + $0x2e8] sm:$0xff]
  %v118 = vld [vmem:[%s1 + $0x2f0] sm:$0xff]
  %v119 = vld [vmem:[%s1 + $0x2f8] sm:$0xff]
  %v120 = vld [vmem:[%s1 + $0x300] sm:$0xff]
  %v121 = vld [vmem:[%s1 + $0x308] sm:$0xff]
  %v122 = vld [vmem:[%s1 + $0x310] sm:$0xff]
  %v123 = vld [vmem:[%s1 + $0x318] sm:$0xff]
  %v124 = vld [vmem:[%s1 + $0x320] sm:$0xff]
  %v125 = vld [vmem:[%s1 + $0x328] sm:$0xff]
  %v126 = vld [vmem:[%s1 + $0x330] sm:$0xff]
  %v127 = vld [vmem:[%s1 + $0x338] sm:$0xff]
  %v128 = vld [vmem:[%s1 + $0x340] sm:$0xff]
  %v129 = vld [vmem:[%s1 + $0x348] sm:$0xff]
  %v130 = vld [vmem:[%s1 + $0x350] sm:$0xff]
  %v131 = vld [vmem:[%s1 + $0x358] sm:$0xff]
  %v132 = vld [vmem:[%s1 + $0x360] sm:$0xff]
  %v133 = vld [vmem:[%s1 + $0x368] sm:$0xff]
  %v134 = vld [vmem:[%s1 + $0x370] sm:$0xff]
  %v135 = vld [vmem:[%s1 + $0x378] sm:$0xff]
  %v136 = vld [vmem:[%s1 + $0x380] sm:$0xff]
  %v137 = vld [vmem:[%s1 + $0x388] sm:$0xff]
  %v138 = vld [vmem:[%s1 + $0x390] sm:$0xff]
  %v139 = vld [vmem:[%s1 + $0x398] sm:$0xff]
  %v140 = vld [vmem:[%s1 + $0x3a0] sm:$0xff]
  %v141 = vld [vmem:[%s1 + $0x3a8] sm:$0xff]
  %v142 = vld [vmem:[%s1 + $0x3b0] sm:$0xff]
  %v143 = vld [vmem:[%s1 + $0x3b8] sm:$0xff]
  %v144 = vld [vmem:[%s1 + $0x3c0] sm:$0xff]
  %v145 = vld [vmem:[%s1 + $0x3c8] sm:$0xff]
  %v146 = vld [vmem:[%s1 + $0x3d0] sm:$0xff]
  %v147 = vld [vmem:[%s1 + $0x3d8] sm:$0xff]
  %v148 = vld [vmem:[%s1 + $0x3e0] sm:$0xff]
  %v149 = vld [vmem:[%s1 + $0x3e8] sm:$0xff]
  %v150 = vld [vmem:[%s1 + $0x3f0] sm:$0xff]
  %v151 = vld [vmem:[%s1 + $0x3f8] sm:$0xff]
  %v152 = vld [vmem:[%s1 + $0x400] sm:$0xff]
  %v153 = vld [vmem:[%s1 + $0x408] sm:$0xff]
  %v154 = vld [vmem:[%s1 + $0x410] sm:$0xff]
  %v155 = vld [vmem:[%s1 + $0x418] sm:$0xff]
  %v156 = vld [vmem:[%s1 + $0x420] sm:$0xff]
  %v157 = vld [vmem:[%s1 + $0x428] sm:$0xff]
  %v158 = vld [vmem:[%s1 + $0x430] sm:$0xff]
  %v159 = vld [vmem:[%s1 + $0x438] sm:$0xff]
  %v160 = vld [vmem:[%s1 + $0x440] sm:$0xff]
  %v161 = vld [vmem:[%s1 + $0x448] sm:$0xff]
  %v162 = vld [vmem:[%s1 + $0x450] sm:$0xff]
  %v163 = vld [vmem:[%s1 + $0x458] sm:$0xff]
  %v164 = vld [vmem:[%s1 + $0x460] sm:$0xff]
  %v165 = vld [vmem:[%s1 + $0x468] sm:$0xff]
  %v166 = vld [vmem:[%s1 + $0x470] sm:$0xff]
  %v167 = vld [vmem:[%s1 + $0x478] sm:$0xff]
  %v168 = vld [vmem:[%s1 + $0x480] sm:$0xff]
  %v169 = vld [vmem:[%s1 + $0x488] sm:$0xff]
  %v170 = vld [vmem:[%s1 + $0x490] sm:$0xff]
  %v171 = vld [vmem:[%s1 + $0x498] sm:$0xff]
  %v172 = vld [vmem:[%s1 + $0x4a0] sm:$0xff]
  %v173 = vld [vmem:[%s1 + $0x4a8] sm:$0xff]
  %v174 = vld [vmem:[%s1 + $0x4b0] sm:$0xff]
  %v175 = vld [vmem:[%s1 + $0x4b8] sm:$0xff]
  %v176 = vld [vmem:[%s1 + $0x4c0] sm:$0xff]
  %v177 = vld [vmem:[%s1 + $0x4c8] sm:$0xff]
  %v178 = vld [vmem:[%s1 + $0x4d0] sm:$0xff]
  %v179 = vld [vmem:[%s1 + $0x4d8] sm:$0xff]
  %v180 = vld [vmem:[%s1 + $0x4e0] sm:$0xff]
  %v181 = vld [vmem:[%s1 + $0x4e8] sm:$0xff]
  %v182 = vld [vmem:[%s1 + $0x4f0] sm:$0xff]
  %v183 = vld [vmem:[%s1 + $0x4f8] sm:$0xff]
  %v184 = vld [vmem:[%s1 + $0x500] sm:$0xff]
  %v185 = vld [vmem:[%s1 + $0x508] sm:$0xff]
  %v186 = vld [vmem:[%s1 + $0x510] sm:$0xff]
  %v187 = vld [vmem:[%s1 + $0x518] sm:$0xff]
  %v188 = vld [vmem:[%s1 + $0x520] sm:$0xff]
  %v189 = vld [vmem:[%s1 + $0x528] sm:$0xff]
  %v190 = vld [vmem:[%s1 + $0x530] sm:$0xff]
  %v191 = vld [vmem:[%s1 + $0x538] sm:$0xff]
  %v192 = vld [vmem:[%s1 + $0x540] sm:$0xff]
  %v193 = vld [vmem:[%s1 + $0x548] sm:$0xff]
  %v194 = vld [vmem:[%s1 + $0x550] sm:$0xff]
  %v195 = vld [vmem:[%s1 + $0x558] sm:$0xff]
  %v196 = vld [vmem:[%s1 + $0x560] sm:$0xff]
  %v197 = vld [vmem:[%s1 + $0x568] sm:$0xff]
  %v198 = vld [vmem:[%s1 + $0x570] sm:$0xff]
  %v199 = vld [vmem:[%s1 + $0x578] sm:$0xff]
  %v200 = vld [vmem:[%s1 + $0x580] sm:$0xff]
  %v201 = vld [vmem:[%s1 + $0x588] sm:$0xff]
  %v202 = vld [vmem:[%s1 + $0x590] sm:$0xff]
  %v203 = vld [vmem:[%s1 + $0x598] sm:$0xff]
  %v204 = vld [vmem:[%s1 + $0x5a0] sm:$0xff]
  %v205 = vld [vmem:[%s1 + $0x5a8] sm:$0xff]
  %v206 = vld [vmem:[%s1 + $0x5b0] sm:$0xff]
  %v207 = vld [vmem:[%s1 + $0x5b8] sm:$0xff]
  %v208 = vld [vmem:[%s1 + $0x5c0] sm:$0xff]
  %v209 = vld [vmem:[%s1 + $0x5c8] sm:$0xff]
  %v210 = vld [vmem:[%s1 + $0x5d0] sm:$0xff]
  %v211 = vld [vmem:[%s1 + $0x5d8] sm:$0xff]
  %v212 = vld [vmem:[%s1 + $0x5e0] sm:$0xff]
  %v213 = vld [vmem:[%s1 + $0x5e8] sm:$0xff]
  %v214 = vld [vmem:[%s1 + $0x5f0] sm:$0xff]
  %v215 = vld [vmem:[%s1 + $0x5f8] sm:$0xff]
  %v216 = vld [vmem:[%s1 + $0x600] sm:$0xff]
  %v217 = vld [vmem:[%s1 + $0x608] sm:$0xff]
  %v218 = vld [vmem:[%s1 + $0x610] sm:$0xff]
  %v219 = vld [vmem:[%s1 + $0x618] sm:$0xff]
  %v220 = vld [vmem:[%s1 + $0x620] sm:$0xff]
  %v221 = vld [vmem:[%s1 + $0x628] sm:$0xff]
  %v222 = vld [vmem:[%s1 + $0x630] sm:$0xff]
  %v223 = vld [vmem:[%s1 + $0x638] sm:$0xff]
  %v224 = vld [vmem:[%s1 + $0x640] sm:$0xff]
  %v225 = vld [vmem:[%s1 + $0x648] sm:$0xff]
  %v226 = vld [vmem:[%s1 + $0x650] sm:$0xff]
  %v227 = vld [vmem:[%s1 + $0x658] sm:$0xff]
  %v228 = vld [vmem:[%s1 + $0x660] sm:$0xff]
  %v229 = vld [vmem:[%s1 + $0x668] sm:$0xff]
  %v230 = vld [vmem:[%s1 + $0x670] sm:$0xff]
  %v231 = vld [vmem:[%s1 + $0x678] sm:$0xff]
  %v232 = vld [vmem:[%s1 + $0x680] sm:$0xff]
  %v233 = vld [vmem:[%s1 + $0x688] sm:$0xff]
  %v234 = vld [vmem:[%s1 + $0x690] sm:$0xff]
  %v235 = vld [vmem:[%s1 + $0x698] sm:$0xff]
  %v236 = vld [vmem:[%s1 + $0x6a0] sm:$0xff]
  %v237 = vld [vmem:[%s1 + $0x6a8] sm:$0xff]
  %v238 = vld [vmem:[%s1 + $0x6b0] sm:$0xff]
  %v239 = vld [vmem:[%s1 + $0x6b8] sm:$0xff]
  %v240 = vld [vmem:[%s1 + $0x6c0] sm:$0xff]
  %v241 = vld [vmem:[%s1 + $0x6c8] sm:$0xff]
  %v242 = vld [vmem:[%s1 + $0x6d0] sm:$0xff]
  %v243 = vld [vmem:[%s1 + $0x6d8] sm:$0xff]
  %v244 = vld [vmem:[%s1 + $0x6e0] sm:$0xff]
  %v245 = vld [vmem:[%s1 + $0x6e8] sm:$0xff]
  %v246 = vld [vmem:[%s1 + $0x6f0] sm:$0xff]
  %v247 = vld [vmem:[%s1 + $0x6f8] sm:$0xff]
  %v248 = vld [vmem:[%s1 + $0x700] sm:$0xff]
  %v249 = vld [vmem:[%s1 + $0x708] sm:$0xff]
  %v250 = vld [vmem:[%s1 + $0x710] sm:$0xff]
  %v251 = vld [vmem:[%s1 + $0x718] sm:$0xff]
  %v252 = vld [vmem:[%s1 + $0x720] sm:$0xff]
  %v253 = vld [vmem:[%s1 + $0x728] sm:$0xff]
  %v254 = vld [vmem:[%s1 + $0x730] sm:$0xff]
  %v255 = vld [vmem:[%s1 + $0x738] sm:$0xff]
  %v256 = vld [vmem:[%s1 + $0x740] sm:$0xff]
  %v257 = vld [vmem:[%s1 + $0x748] sm:$0xff]
  %v258 = vld [vmem:[%s1 + $0x750] sm:$0xff]
  %v259 = vld [vmem:[%s1 + $0x758] sm:$0xff]
  %v260 = vld [vmem:[%s1 + $0x760] sm:$0xff]
  %v261 = vld [vmem:[%s1 + $0x768] sm:$0xff]
  %v262 = vld [vmem:[%s1 + $0x770] sm:$0xff]
  %v263 = vld [vmem:[%s1 + $0x778] sm:$0xff]
  %v264 = vld [vmem:[%s1 + $0x780] sm:$0xff]
  %v265 = vld [vmem:[%s1 + $0x788] sm:$0xff]
  %v266 = vld [vmem:[%s1 + $0x790] sm:$0xff]
  %v267 = vld [vmem:[%s1 + $0x798] sm:$0xff]
  %v268 = vld [vmem:[%s1 + $0x7a0] sm:$0xff]
  %v269 = vld [vmem:[%s1 + $0x7a8] sm:$0xff]
  %v270 = vld [vmem:[%s1 + $0x7b0] sm:$0xff]
  %v271 = vld [vmem:[%s1 + $0x7b8] sm:$0xff]
  %v272 = vld [vmem:[%s1 + $0x7c0] sm:$0xff]
  %v273 = vld [vmem:[%s1 + $0x7c8] sm:$0xff]
  %v274 = vld [vmem:[%s1 + $0x7d0] sm:$0xff]
  %v275 = vld [vmem:[%s1 + $0x7d8] sm:$0xff]
  %v276 = vld [vmem:[%s1 + $0x7e0] sm:$0xff]
  %v277 = vld [vmem:[%s1 + $0x7e8] sm:$0xff]
  %v278 = vld [vmem:[%s1 + $0x7f0] sm:$0xff]
  %v279 = vld [vmem:[%s1 + $0x7f8] sm:$0xff]
  %v280 = vld [vmem:[%s1 + $0x800] sm:$0xff]
  %v281 = vld [vmem:[%s1 + $0x808] sm:$0xff]
  %v282 = vld [vmem:[%s1 + $0x810] sm:$0xff]
  %v283 = vld [vmem:[%s1 + $0x818] sm:$0xff]
  %v284 = vld [vmem:[%s1 + $0x820] sm:$0xff]
  %v285 = vld [vmem:[%s1 + $0x828] sm:$0xff]
  %v286 = vld [vmem:[%s1 + $0x830] sm:$0xff]
  %v287 = vld [vmem:[%s1 + $0x838] sm:$0xff]
  %v288 = vld [vmem:[%s1 + $0x840] sm:$0xff]
  %v289 = vld [vmem:[%s1 + $0x848] sm:$0xff]
  %v290 = vld [vmem:[%s1 + $0x850] sm:$0xff]
  %v291 = vld [vmem:[%s1 + $0x858] sm:$0xff]
  %v292 = vld [vmem:[%s1 + $0x860] sm:$0xff]
  %v293 = vld [vmem:[%s1 + $0x868] sm:$0xff]
  %v294 = vld [vmem:[%s1 + $0x870] sm:$0xff]
  %v295 = vld [vmem:[%s1 + $0x878] sm:$0xff]
  %v296 = vld [vmem:[%s1 + $0x880] sm:$0xff]
  %v297 = vld [vmem:[%s1 + $0x888] sm:$0xff]
  %v298 = vld [vmem:[%s1 + $0x890] sm:$0xff]
  %v299 = vld [vmem:[%s1 + $0x898] sm:$0xff]
  %v300 = vld [vmem:[%s1 + $0x8a0] sm:$0xff]
  %v301 = vld [vmem:[%s1 + $0x8a8] sm:$0xff]
  %v302 = vld [vmem:[%s1 + $0x8b0] sm:$0xff]
  %v303 = vld [vmem:[%s1 + $0x8b8] sm:$0xff]
  %v304 = vld [vmem:[%s1 + $0x8c0] sm:$0xff]
  %v305 = vld [vmem:[%s1 + $0x8c8] sm:$0xff]
  %v306 = vld [vmem:[%s1 + $0x8d0] sm:$0xff]
  %v307 = vld [vmem:[%s1 + $0x8d8] sm:$0xff]
  %v308 = vld [vmem:[%s1 + $0x8e0] sm:$0xff]
  %v309 = vld [vmem:[%s1 + $0x8e8] sm:$0xff]
  %v310 = vld [vmem:[%s1 + $0x8f0] sm:$0xff]
  %v311 = vld [vmem:[%s1 + $0x8f8] sm:$0xff]
  %v312 = vld [vmem:[%s2] sm:$0x3f]
  %v314 = vlaneseq
  %v315 = vshrl.u32 %v314, 7
  %v316 = vsub.s32 0, %v315
  %v317 = vrot.slane %v312, %v316
  %v318 = vlaneseq
  %v319 = vshrl.u32 %v318, 7
  %v320 = vsub.s32 1, %v319
  %v321 = vrot.slane %v312, %v320
  %v322 = vlaneseq
  %v323 = vshrl.u32 %v322, 7
  %v324 = vsub.s32 2, %v323
  %v325 = vrot.slane %v312, %v324
  %v326 = vlaneseq
  %v327 = vshrl.u32 %v326, 7
  %v328 = vsub.s32 3, %v327
  %v329 = vrot.slane %v312, %v328
  %v330 = vlaneseq
  %v331 = vshrl.u32 %v330, 7
  %v332 = vsub.s32 4, %v331
  %v333 = vrot.slane %v312, %v332
  %v334 = vlaneseq
  %v335 = vshrl.u32 %v334, 7
  %v336 = vsub.s32 5, %v335
  %v337 = vrot.slane %v312, %v336
  %v347 = vunpack.c.l.b16 %v21
  %v348 = vunpack.c.h.b16 %v21
  %v349 = vunpack.c.l.b16 %v22
  %v350 = vunpack.c.h.b16 %v22
  %v351 = vunpack.c.l.b16 %v23
  %v352 = vunpack.c.h.b16 %v23
  %v353 = vpack.c.b16 %v347, %v347
  %v354 = vpack.c.b16 %v348, %v348
  %v355 = vpack.c.b16 %v349, %v349
  %v356 = vpack.c.b16 %v350, %v350
  %v357 = vpack.c.b16 %v351, %v351
  %v358 = vpack.c.b16 %v352, %v352
  %v653 = vunpack.c.l.b16 %v24
  %v654 = vunpack.c.h.b16 %v24
  %v655 = vunpack.c.l.b16 %v25
  %v656 = vunpack.c.h.b16 %v25
  %v657 = vunpack.c.l.b16 %v26
  %v658 = vunpack.c.h.b16 %v26
  %v659 = vunpack.c.l.b16 %v27
  %v660 = vunpack.c.h.b16 %v27
  %v661 = vunpack.c.l.b16 %v28
  %v662 = vunpack.c.h.b16 %v28
  %v663 = vunpack.c.l.b16 %v29
  %v664 = vunpack.c.h.b16 %v29
  %v665 = vunpack.c.l.b16 %v30
  %v666 = vunpack.c.h.b16 %v30
  %v667 = vunpack.c.l.b16 %v31
  %v668 = vunpack.c.h.b16 %v31
  %v669 = vunpack.c.l.b16 %v32
  %v670 = vunpack.c.h.b16 %v32
  %v671 = vunpack.c.l.b16 %v33
  %v672 = vunpack.c.h.b16 %v33
  %v673 = vunpack.c.l.b16 %v34
  %v674 = vunpack.c.h.b16 %v34
  %v675 = vunpack.c.l.b16 %v35
  %v676 = vunpack.c.h.b16 %v35
  %v677 = vunpack.c.l.b16 %v36
  %v678 = vunpack.c.h.b16 %v36
  %v679 = vunpack.c.l.b16 %v37
  %v680 = vunpack.c.h.b16 %v37
  %v681 = vunpack.c.l.b16 %v38
  %v682 = vunpack.c.h.b16 %v38
  %v683 = vunpack.c.l.b16 %v39
  %v684 = vunpack.c.h.b16 %v39
  %v685 = vunpack.c.l.b16 %v40
  %v686 = vunpack.c.h.b16 %v40
  %v687 = vunpack.c.l.b16 %v41
  %v688 = vunpack.c.h.b16 %v41
  %v689 = vunpack.c.l.b16 %v42
  %v690 = vunpack.c.h.b16 %v42
  %v691 = vunpack.c.l.b16 %v43
  %v692 = vunpack.c.h.b16 %v43
  %v693 = vunpack.c.l.b16 %v44
  %v694 = vunpack.c.h.b16 %v44
  %v695 = vunpack.c.l.b16 %v45
  %v696 = vunpack.c.h.b16 %v45
  %v697 = vunpack.c.l.b16 %v46
  %v698 = vunpack.c.h.b16 %v46
  %v699 = vunpack.c.l.b16 %v47
  %v700 = vunpack.c.h.b16 %v47
  %v701 = vunpack.c.l.b16 %v48
  %v702 = vunpack.c.h.b16 %v48
  %v703 = vunpack.c.l.b16 %v49
  %v704 = vunpack.c.h.b16 %v49
  %v705 = vunpack.c.l.b16 %v50
  %v706 = vunpack.c.h.b16 %v50
  %v707 = vunpack.c.l.b16 %v51
  %v708 = vunpack.c.h.b16 %v51
  %v709 = vunpack.c.l.b16 %v52
  %v710 = vunpack.c.h.b16 %v52
  %v711 = vunpack.c.l.b16 %v53
  %v712 = vunpack.c.h.b16 %v53
  %v713 = vunpack.c.l.b16 %v54
  %v714 = vunpack.c.h.b16 %v54
  %v715 = vunpack.c.l.b16 %v55
  %v716 = vunpack.c.h.b16 %v55
  %v717 = vunpack.c.l.b16 %v56
  %v718 = vunpack.c.h.b16 %v56
  %v719 = vunpack.c.l.b16 %v57
  %v720 = vunpack.c.h.b16 %v57
  %v721 = vunpack.c.l.b16 %v58
  %v722 = vunpack.c.h.b16 %v58
  %v723 = vunpack.c.l.b16 %v59
  %v724 = vunpack.c.h.b16 %v59
  %v725 = vunpack.c.l.b16 %v60
  %v726 = vunpack.c.h.b16 %v60
  %v727 = vunpack.c.l.b16 %v61
  %v728 = vunpack.c.h.b16 %v61
  %v729 = vunpack.c.l.b16 %v62
  %v730 = vunpack.c.h.b16 %v62
  %v731 = vunpack.c.l.b16 %v63
  %v732 = vunpack.c.h.b16 %v63
  %v733 = vunpack.c.l.b16 %v64
  %v734 = vunpack.c.h.b16 %v64
  %v735 = vunpack.c.l.b16 %v65
  %v736 = vunpack.c.h.b16 %v65
  %v737 = vunpack.c.l.b16 %v66
  %v738 = vunpack.c.h.b16 %v66
  %v739 = vunpack.c.l.b16 %v67
  %v740 = vunpack.c.h.b16 %v67
  %v741 = vunpack.c.l.b16 %v68
  %v742 = vunpack.c.h.b16 %v68
  %v743 = vunpack.c.l.b16 %v69
  %v744 = vunpack.c.h.b16 %v69
  %v745 = vunpack.c.l.b16 %v70
  %v746 = vunpack.c.h.b16 %v70
  %v747 = vunpack.c.l.b16 %v71
  %v748 = vunpack.c.h.b16 %v71
  %v749 = vunpack.c.l.b16 %v72
  %v750 = vunpack.c.h.b16 %v72
  %v751 = vunpack.c.l.b16 %v73
  %v752 = vunpack.c.h.b16 %v73
  %v753 = vunpack.c.l.b16 %v74
  %v754 = vunpack.c.h.b16 %v74
  %v755 = vunpack.c.l.b16 %v75
  %v756 = vunpack.c.h.b16 %v75
  %v757 = vunpack.c.l.b16 %v76
  %v758 = vunpack.c.h.b16 %v76
  %v759 = vunpack.c.l.b16 %v77
  %v760 = vunpack.c.h.b16 %v77
  %v761 = vunpack.c.l.b16 %v78
  %v762 = vunpack.c.h.b16 %v78
  %v763 = vunpack.c.l.b16 %v79
  %v764 = vunpack.c.h.b16 %v79
  %v765 = vunpack.c.l.b16 %v80
  %v766 = vunpack.c.h.b16 %v80
  %v767 = vunpack.c.l.b16 %v81
  %v768 = vunpack.c.h.b16 %v81
  %v769 = vunpack.c.l.b16 %v82
  %v770 = vunpack.c.h.b16 %v82
  %v771 = vunpack.c.l.b16 %v83
  %v772 = vunpack.c.h.b16 %v83
  %v773 = vunpack.c.l.b16 %v84
  %v774 = vunpack.c.h.b16 %v84
  %v775 = vunpack.c.l.b16 %v85
  %v776 = vunpack.c.h.b16 %v85
  %v777 = vunpack.c.l.b16 %v86
  %v778 = vunpack.c.h.b16 %v86
  %v779 = vunpack.c.l.b16 %v87
  %v780 = vunpack.c.h.b16 %v87
  %v781 = vunpack.c.l.b16 %v88
  %v782 = vunpack.c.h.b16 %v88
  %v783 = vunpack.c.l.b16 %v89
  %v784 = vunpack.c.h.b16 %v89
  %v785 = vunpack.c.l.b16 %v90
  %v786 = vunpack.c.h.b16 %v90
  %v787 = vunpack.c.l.b16 %v91
  %v788 = vunpack.c.h.b16 %v91
  %v789 = vunpack.c.l.b16 %v92
  %v790 = vunpack.c.h.b16 %v92
  %v791 = vunpack.c.l.b16 %v93
  %v792 = vunpack.c.h.b16 %v93
  %v793 = vunpack.c.l.b16 %v94
  %v794 = vunpack.c.h.b16 %v94
  %v795 = vunpack.c.l.b16 %v95
  %v796 = vunpack.c.h.b16 %v95
  %v797 = vunpack.c.l.b16 %v96
  %v798 = vunpack.c.h.b16 %v96
  %v799 = vunpack.c.l.b16 %v97
  %v800 = vunpack.c.h.b16 %v97
  %v801 = vunpack.c.l.b16 %v98
  %v802 = vunpack.c.h.b16 %v98
  %v803 = vunpack.c.l.b16 %v99
  %v804 = vunpack.c.h.b16 %v99
  %v805 = vunpack.c.l.b16 %v100
  %v806 = vunpack.c.h.b16 %v100
  %v807 = vunpack.c.l.b16 %v101
  %v808 = vunpack.c.h.b16 %v101
  %v809 = vunpack.c.l.b16 %v102
  %v810 = vunpack.c.h.b16 %v102
  %v811 = vunpack.c.l.b16 %v103
  %v812 = vunpack.c.h.b16 %v103
  %v813 = vunpack.c.l.b16 %v104
  %v814 = vunpack.c.h.b16 %v104
  %v815 = vunpack.c.l.b16 %v105
  %v816 = vunpack.c.h.b16 %v105
  %v817 = vunpack.c.l.b16 %v106
  %v818 = vunpack.c.h.b16 %v106
  %v819 = vunpack.c.l.b16 %v107
  %v820 = vunpack.c.h.b16 %v107
  %v821 = vunpack.c.l.b16 %v108
  %v822 = vunpack.c.h.b16 %v108
  %v823 = vunpack.c.l.b16 %v109
  %v824 = vunpack.c.h.b16 %v109
  %v825 = vunpack.c.l.b16 %v110
  %v826 = vunpack.c.h.b16 %v110
  %v827 = vunpack.c.l.b16 %v111
  %v828 = vunpack.c.h.b16 %v111
  %v829 = vunpack.c.l.b16 %v112
  %v830 = vunpack.c.h.b16 %v112
  %v831 = vunpack.c.l.b16 %v113
  %v832 = vunpack.c.h.b16 %v113
  %v833 = vunpack.c.l.b16 %v114
  %v834 = vunpack.c.h.b16 %v114
  %v835 = vunpack.c.l.b16 %v115
  %v836 = vunpack.c.h.b16 %v115
  %v837 = vunpack.c.l.b16 %v116
  %v838 = vunpack.c.h.b16 %v116
  %v839 = vunpack.c.l.b16 %v117
  %v840 = vunpack.c.h.b16 %v117
  %v841 = vunpack.c.l.b16 %v118
  %v842 = vunpack.c.h.b16 %v118
  %v843 = vunpack.c.l.b16 %v119
  %v844 = vunpack.c.h.b16 %v119
  %v845 = vunpack.c.l.b16 %v120
  %v846 = vunpack.c.h.b16 %v120
  %v847 = vunpack.c.l.b16 %v121
  %v848 = vunpack.c.h.b16 %v121
  %v849 = vunpack.c.l.b16 %v122
  %v850 = vunpack.c.h.b16 %v122
  %v851 = vunpack.c.l.b16 %v123
  %v852 = vunpack.c.h.b16 %v123
  %v853 = vunpack.c.l.b16 %v124
  %v854 = vunpack.c.h.b16 %v124
  %v855 = vunpack.c.l.b16 %v125
  %v856 = vunpack.c.h.b16 %v125
  %v857 = vunpack.c.l.b16 %v126
  %v858 = vunpack.c.h.b16 %v126
  %v859 = vunpack.c.l.b16 %v127
  %v860 = vunpack.c.h.b16 %v127
  %v861 = vunpack.c.l.b16 %v128
  %v862 = vunpack.c.h.b16 %v128
  %v863 = vunpack.c.l.b16 %v129
  %v864 = vunpack.c.h.b16 %v129
  %v865 = vunpack.c.l.b16 %v130
  %v866 = vunpack.c.h.b16 %v130
  %v867 = vunpack.c.l.b16 %v131
  %v868 = vunpack.c.h.b16 %v131
  %v869 = vunpack.c.l.b16 %v132
  %v870 = vunpack.c.h.b16 %v132
  %v871 = vunpack.c.l.b16 %v133
  %v872 = vunpack.c.h.b16 %v133
  %v873 = vunpack.c.l.b16 %v134
  %v874 = vunpack.c.h.b16 %v134
  %v875 = vunpack.c.l.b16 %v135
  %v876 = vunpack.c.h.b16 %v135
  %v877 = vunpack.c.l.b16 %v136
  %v878 = vunpack.c.h.b16 %v136
  %v879 = vunpack.c.l.b16 %v137
  %v880 = vunpack.c.h.b16 %v137
  %v881 = vunpack.c.l.b16 %v138
  %v882 = vunpack.c.h.b16 %v138
  %v883 = vunpack.c.l.b16 %v139
  %v884 = vunpack.c.h.b16 %v139
  %v885 = vunpack.c.l.b16 %v140
  %v886 = vunpack.c.h.b16 %v140
  %v887 = vunpack.c.l.b16 %v141
  %v888 = vunpack.c.h.b16 %v141
  %v889 = vunpack.c.l.b16 %v142
  %v890 = vunpack.c.h.b16 %v142
  %v891 = vunpack.c.l.b16 %v143
  %v892 = vunpack.c.h.b16 %v143
  %v893 = vunpack.c.l.b16 %v144
  %v894 = vunpack.c.h.b16 %v144
  %v895 = vunpack.c.l.b16 %v145
  %v896 = vunpack.c.h.b16 %v145
  %v897 = vunpack.c.l.b16 %v146
  %v898 = vunpack.c.h.b16 %v146
  %v899 = vunpack.c.l.b16 %v147
  %v900 = vunpack.c.h.b16 %v147
  %v901 = vunpack.c.l.b16 %v148
  %v902 = vunpack.c.h.b16 %v148
  %v903 = vunpack.c.l.b16 %v149
  %v904 = vunpack.c.h.b16 %v149
  %v905 = vunpack.c.l.b16 %v150
  %v906 = vunpack.c.h.b16 %v150
  %v907 = vunpack.c.l.b16 %v151
  %v908 = vunpack.c.h.b16 %v151
  %v909 = vunpack.c.l.b16 %v152
  %v910 = vunpack.c.h.b16 %v152
  %v911 = vunpack.c.l.b16 %v153
  %v912 = vunpack.c.h.b16 %v153
  %v913 = vunpack.c.l.b16 %v154
  %v914 = vunpack.c.h.b16 %v154
  %v915 = vunpack.c.l.b16 %v155
  %v916 = vunpack.c.h.b16 %v155
  %v917 = vunpack.c.l.b16 %v156
  %v918 = vunpack.c.h.b16 %v156
  %v919 = vunpack.c.l.b16 %v157
  %v920 = vunpack.c.h.b16 %v157
  %v921 = vunpack.c.l.b16 %v158
  %v922 = vunpack.c.h.b16 %v158
  %v923 = vunpack.c.l.b16 %v159
  %v924 = vunpack.c.h.b16 %v159
  %v925 = vunpack.c.l.b16 %v160
  %v926 = vunpack.c.h.b16 %v160
  %v927 = vunpack.c.l.b16 %v161
  %v928 = vunpack.c.h.b16 %v161
  %v929 = vunpack.c.l.b16 %v162
  %v930 = vunpack.c.h.b16 %v162
  %v931 = vunpack.c.l.b16 %v163
  %v932 = vunpack.c.h.b16 %v163
  %v933 = vunpack.c.l.b16 %v164
  %v934 = vunpack.c.h.b16 %v164
  %v935 = vunpack.c.l.b16 %v165
  %v936 = vunpack.c.h.b16 %v165
  %v937 = vunpack.c.l.b16 %v166
  %v938 = vunpack.c.h.b16 %v166
  %v939 = vunpack.c.l.b16 %v167
  %v940 = vunpack.c.h.b16 %v167
  %v941 = vunpack.c.l.b16 %v168
  %v942 = vunpack.c.h.b16 %v168
  %v943 = vunpack.c.l.b16 %v169
  %v944 = vunpack.c.h.b16 %v169
  %v945 = vunpack.c.l.b16 %v170
  %v946 = vunpack.c.h.b16 %v170
  %v947 = vunpack.c.l.b16 %v171
  %v948 = vunpack.c.h.b16 %v171
  %v949 = vunpack.c.l.b16 %v172
  %v950 = vunpack.c.h.b16 %v172
  %v951 = vunpack.c.l.b16 %v173
  %v952 = vunpack.c.h.b16 %v173
  %v953 = vunpack.c.l.b16 %v174
  %v954 = vunpack.c.h.b16 %v174
  %v955 = vunpack.c.l.b16 %v175
  %v956 = vunpack.c.h.b16 %v175
  %v957 = vunpack.c.l.b16 %v176
  %v958 = vunpack.c.h.b16 %v176
  %v959 = vunpack.c.l.b16 %v177
  %v960 = vunpack.c.h.b16 %v177
  %v961 = vunpack.c.l.b16 %v178
  %v962 = vunpack.c.h.b16 %v178
  %v963 = vunpack.c.l.b16 %v179
  %v964 = vunpack.c.h.b16 %v179
  %v965 = vunpack.c.l.b16 %v180
  %v966 = vunpack.c.h.b16 %v180
  %v967 = vunpack.c.l.b16 %v181
  %v968 = vunpack.c.h.b16 %v181
  %v969 = vunpack.c.l.b16 %v182
  %v970 = vunpack.c.h.b16 %v182
  %v971 = vunpack.c.l.b16 %v183
  %v972 = vunpack.c.h.b16 %v183
  %v973 = vunpack.c.l.b16 %v184
  %v974 = vunpack.c.h.b16 %v184
  %v975 = vunpack.c.l.b16 %v185
  %v976 = vunpack.c.h.b16 %v185
  %v977 = vunpack.c.l.b16 %v186
  %v978 = vunpack.c.h.b16 %v186
  %v979 = vunpack.c.l.b16 %v187
  %v980 = vunpack.c.h.b16 %v187
  %v981 = vunpack.c.l.b16 %v188
  %v982 = vunpack.c.h.b16 %v188
  %v983 = vunpack.c.l.b16 %v189
  %v984 = vunpack.c.h.b16 %v189
  %v985 = vunpack.c.l.b16 %v190
  %v986 = vunpack.c.h.b16 %v190
  %v987 = vunpack.c.l.b16 %v191
  %v988 = vunpack.c.h.b16 %v191
  %v989 = vunpack.c.l.b16 %v192
  %v990 = vunpack.c.h.b16 %v192
  %v991 = vunpack.c.l.b16 %v193
  %v992 = vunpack.c.h.b16 %v193
  %v993 = vunpack.c.l.b16 %v194
  %v994 = vunpack.c.h.b16 %v194
  %v995 = vunpack.c.l.b16 %v195
  %v996 = vunpack.c.h.b16 %v195
  %v997 = vunpack.c.l.b16 %v196
  %v998 = vunpack.c.h.b16 %v196
  %v999 = vunpack.c.l.b16 %v197
  %v1000 = vunpack.c.h.b16 %v197
  %v1001 = vunpack.c.l.b16 %v198
  %v1002 = vunpack.c.h.b16 %v198
  %v1003 = vunpack.c.l.b16 %v199
  %v1004 = vunpack.c.h.b16 %v199
  %v1005 = vunpack.c.l.b16 %v200
  %v1006 = vunpack.c.h.b16 %v200
  %v1007 = vunpack.c.l.b16 %v201
  %v1008 = vunpack.c.h.b16 %v201
  %v1009 = vunpack.c.l.b16 %v202
  %v1010 = vunpack.c.h.b16 %v202
  %v1011 = vunpack.c.l.b16 %v203
  %v1012 = vunpack.c.h.b16 %v203
  %v1013 = vunpack.c.l.b16 %v204
  %v1014 = vunpack.c.h.b16 %v204
  %v1015 = vunpack.c.l.b16 %v205
  %v1016 = vunpack.c.h.b16 %v205
  %v1017 = vunpack.c.l.b16 %v206
  %v1018 = vunpack.c.h.b16 %v206
  %v1019 = vunpack.c.l.b16 %v207
  %v1020 = vunpack.c.h.b16 %v207
  %v1021 = vunpack.c.l.b16 %v208
  %v1022 = vunpack.c.h.b16 %v208
  %v1023 = vunpack.c.l.b16 %v209
  %v1024 = vunpack.c.h.b16 %v209
  %v1025 = vunpack.c.l.b16 %v210
  %v1026 = vunpack.c.h.b16 %v210
  %v1027 = vunpack.c.l.b16 %v211
  %v1028 = vunpack.c.h.b16 %v211
  %v1029 = vunpack.c.l.b16 %v212
  %v1030 = vunpack.c.h.b16 %v212
  %v1031 = vunpack.c.l.b16 %v213
  %v1032 = vunpack.c.h.b16 %v213
  %v1033 = vunpack.c.l.b16 %v214
  %v1034 = vunpack.c.h.b16 %v214
  %v1035 = vunpack.c.l.b16 %v215
  %v1036 = vunpack.c.h.b16 %v215
  %v1037 = vunpack.c.l.b16 %v216
  %v1038 = vunpack.c.h.b16 %v216
  %v1039 = vunpack.c.l.b16 %v217
  %v1040 = vunpack.c.h.b16 %v217
  %v1041 = vunpack.c.l.b16 %v218
  %v1042 = vunpack.c.h.b16 %v218
  %v1043 = vunpack.c.l.b16 %v219
  %v1044 = vunpack.c.h.b16 %v219
  %v1045 = vunpack.c.l.b16 %v220
  %v1046 = vunpack.c.h.b16 %v220
  %v1047 = vunpack.c.l.b16 %v221
  %v1048 = vunpack.c.h.b16 %v221
  %v1049 = vunpack.c.l.b16 %v222
  %v1050 = vunpack.c.h.b16 %v222
  %v1051 = vunpack.c.l.b16 %v223
  %v1052 = vunpack.c.h.b16 %v223
  %v1053 = vunpack.c.l.b16 %v224
  %v1054 = vunpack.c.h.b16 %v224
  %v1055 = vunpack.c.l.b16 %v225
  %v1056 = vunpack.c.h.b16 %v225
  %v1057 = vunpack.c.l.b16 %v226
  %v1058 = vunpack.c.h.b16 %v226
  %v1059 = vunpack.c.l.b16 %v227
  %v1060 = vunpack.c.h.b16 %v227
  %v1061 = vunpack.c.l.b16 %v228
  %v1062 = vunpack.c.h.b16 %v228
  %v1063 = vunpack.c.l.b16 %v229
  %v1064 = vunpack.c.h.b16 %v229
  %v1065 = vunpack.c.l.b16 %v230
  %v1066 = vunpack.c.h.b16 %v230
  %v1067 = vunpack.c.l.b16 %v231
  %v1068 = vunpack.c.h.b16 %v231
  %v1069 = vunpack.c.l.b16 %v232
  %v1070 = vunpack.c.h.b16 %v232
  %v1071 = vunpack.c.l.b16 %v233
  %v1072 = vunpack.c.h.b16 %v233
  %v1073 = vunpack.c.l.b16 %v234
  %v1074 = vunpack.c.h.b16 %v234
  %v1075 = vunpack.c.l.b16 %v235
  %v1076 = vunpack.c.h.b16 %v235
  %v1077 = vunpack.c.l.b16 %v236
  %v1078 = vunpack.c.h.b16 %v236
  %v1079 = vunpack.c.l.b16 %v237
  %v1080 = vunpack.c.h.b16 %v237
  %v1081 = vunpack.c.l.b16 %v238
  %v1082 = vunpack.c.h.b16 %v238
  %v1083 = vunpack.c.l.b16 %v239
  %v1084 = vunpack.c.h.b16 %v239
  %v1085 = vunpack.c.l.b16 %v240
  %v1086 = vunpack.c.h.b16 %v240
  %v1087 = vunpack.c.l.b16 %v241
  %v1088 = vunpack.c.h.b16 %v241
  %v1089 = vunpack.c.l.b16 %v242
  %v1090 = vunpack.c.h.b16 %v242
  %v1091 = vunpack.c.l.b16 %v243
  %v1092 = vunpack.c.h.b16 %v243
  %v1093 = vunpack.c.l.b16 %v244
  %v1094 = vunpack.c.h.b16 %v244
  %v1095 = vunpack.c.l.b16 %v245
  %v1096 = vunpack.c.h.b16 %v245
  %v1097 = vunpack.c.l.b16 %v246
  %v1098 = vunpack.c.h.b16 %v246
  %v1099 = vunpack.c.l.b16 %v247
  %v1100 = vunpack.c.h.b16 %v247
  %v1101 = vunpack.c.l.b16 %v248
  %v1102 = vunpack.c.h.b16 %v248
  %v1103 = vunpack.c.l.b16 %v249
  %v1104 = vunpack.c.h.b16 %v249
  %v1105 = vunpack.c.l.b16 %v250
  %v1106 = vunpack.c.h.b16 %v250
  %v1107 = vunpack.c.l.b16 %v251
  %v1108 = vunpack.c.h.b16 %v251
  %v1109 = vunpack.c.l.b16 %v252
  %v1110 = vunpack.c.h.b16 %v252
  %v1111 = vunpack.c.l.b16 %v253
  %v1112 = vunpack.c.h.b16 %v253
  %v1113 = vunpack.c.l.b16 %v254
  %v1114 = vunpack.c.h.b16 %v254
  %v1115 = vunpack.c.l.b16 %v255
  %v1116 = vunpack.c.h.b16 %v255
  %v1117 = vunpack.c.l.b16 %v256
  %v1118 = vunpack.c.h.b16 %v256
  %v1119 = vunpack.c.l.b16 %v257
  %v1120 = vunpack.c.h.b16 %v257
  %v1121 = vunpack.c.l.b16 %v258
  %v1122 = vunpack.c.h.b16 %v258
  %v1123 = vunpack.c.l.b16 %v259
  %v1124 = vunpack.c.h.b16 %v259
  %v1125 = vunpack.c.l.b16 %v260
  %v1126 = vunpack.c.h.b16 %v260
  %v1127 = vunpack.c.l.b16 %v261
  %v1128 = vunpack.c.h.b16 %v261
  %v1129 = vunpack.c.l.b16 %v262
  %v1130 = vunpack.c.h.b16 %v262
  %v1131 = vunpack.c.l.b16 %v263
  %v1132 = vunpack.c.h.b16 %v263
  %v1133 = vunpack.c.l.b16 %v264
  %v1134 = vunpack.c.h.b16 %v264
  %v1135 = vunpack.c.l.b16 %v265
  %v1136 = vunpack.c.h.b16 %v265
  %v1137 = vunpack.c.l.b16 %v266
  %v1138 = vunpack.c.h.b16 %v266
  %v1139 = vunpack.c.l.b16 %v267
  %v1140 = vunpack.c.h.b16 %v267
  %v1141 = vunpack.c.l.b16 %v268
  %v1142 = vunpack.c.h.b16 %v268
  %v1143 = vunpack.c.l.b16 %v269
  %v1144 = vunpack.c.h.b16 %v269
  %v1145 = vunpack.c.l.b16 %v270
  %v1146 = vunpack.c.h.b16 %v270
  %v1147 = vunpack.c.l.b16 %v271
  %v1148 = vunpack.c.h.b16 %v271
  %v1149 = vunpack.c.l.b16 %v272
  %v1150 = vunpack.c.h.b16 %v272
  %v1151 = vunpack.c.l.b16 %v273
  %v1152 = vunpack.c.h.b16 %v273
  %v1153 = vunpack.c.l.b16 %v274
  %v1154 = vunpack.c.h.b16 %v274
  %v1155 = vunpack.c.l.b16 %v275
  %v1156 = vunpack.c.h.b16 %v275
  %v1157 = vunpack.c.l.b16 %v276
  %v1158 = vunpack.c.h.b16 %v276
  %v1159 = vunpack.c.l.b16 %v277
  %v1160 = vunpack.c.h.b16 %v277
  %v1161 = vunpack.c.l.b16 %v278
  %v1162 = vunpack.c.h.b16 %v278
  %v1163 = vunpack.c.l.b16 %v279
  %v1164 = vunpack.c.h.b16 %v279
  %v1165 = vunpack.c.l.b16 %v280
  %v1166 = vunpack.c.h.b16 %v280
  %v1167 = vunpack.c.l.b16 %v281
  %v1168 = vunpack.c.h.b16 %v281
  %v1169 = vunpack.c.l.b16 %v282
  %v1170 = vunpack.c.h.b16 %v282
  %v1171 = vunpack.c.l.b16 %v283
  %v1172 = vunpack.c.h.b16 %v283
  %v1173 = vunpack.c.l.b16 %v284
  %v1174 = vunpack.c.h.b16 %v284
  %v1175 = vunpack.c.l.b16 %v285
  %v1176 = vunpack.c.h.b16 %v285
  %v1177 = vunpack.c.l.b16 %v286
  %v1178 = vunpack.c.h.b16 %v286
  %v1179 = vunpack.c.l.b16 %v287
  %v1180 = vunpack.c.h.b16 %v287
  %v1181 = vunpack.c.l.b16 %v288
  %v1182 = vunpack.c.h.b16 %v288
  %v1183 = vunpack.c.l.b16 %v289
  %v1184 = vunpack.c.h.b16 %v289
  %v1185 = vunpack.c.l.b16 %v290
  %v1186 = vunpack.c.h.b16 %v290
  %v1187 = vunpack.c.l.b16 %v291
  %v1188 = vunpack.c.h.b16 %v291
  %v1189 = vunpack.c.l.b16 %v292
  %v1190 = vunpack.c.h.b16 %v292
  %v1191 = vunpack.c.l.b16 %v293
  %v1192 = vunpack.c.h.b16 %v293
  %v1193 = vunpack.c.l.b16 %v294
  %v1194 = vunpack.c.h.b16 %v294
  %v1195 = vunpack.c.l.b16 %v295
  %v1196 = vunpack.c.h.b16 %v295
  %v1197 = vunpack.c.l.b16 %v296
  %v1198 = vunpack.c.h.b16 %v296
  %v1199 = vunpack.c.l.b16 %v297
  %v1200 = vunpack.c.h.b16 %v297
  %v1201 = vunpack.c.l.b16 %v298
  %v1202 = vunpack.c.h.b16 %v298
  %v1203 = vunpack.c.l.b16 %v299
  %v1204 = vunpack.c.h.b16 %v299
  %v1205 = vunpack.c.l.b16 %v300
  %v1206 = vunpack.c.h.b16 %v300
  %v1207 = vunpack.c.l.b16 %v301
  %v1208 = vunpack.c.h.b16 %v301
  %v1209 = vunpack.c.l.b16 %v302
  %v1210 = vunpack.c.h.b16 %v302
  %v1211 = vunpack.c.l.b16 %v303
  %v1212 = vunpack.c.h.b16 %v303
  %v1213 = vunpack.c.l.b16 %v304
  %v1214 = vunpack.c.h.b16 %v304
  %v1215 = vunpack.c.l.b16 %v305
  %v1216 = vunpack.c.h.b16 %v305
  %v1217 = vunpack.c.l.b16 %v306
  %v1218 = vunpack.c.h.b16 %v306
  %v1219 = vunpack.c.l.b16 %v307
  %v1220 = vunpack.c.h.b16 %v307
  %v1221 = vunpack.c.l.b16 %v308
  %v1222 = vunpack.c.h.b16 %v308
  %v1223 = vunpack.c.l.b16 %v309
  %v1224 = vunpack.c.h.b16 %v309
  %v1225 = vunpack.c.l.b16 %v310
  %v1226 = vunpack.c.h.b16 %v310
  %v1227 = vunpack.c.l.b16 %v311
  %v1228 = vunpack.c.h.b16 %v311
  %v1229 = vpack.c.b16 %v659, %v653
  %v1230 = vpack.c.b16 %v660, %v654
  %v1231 = vpack.c.b16 %v661, %v655
  %v1232 = vpack.c.b16 %v662, %v656
  %v1233 = vpack.c.b16 %v663, %v657
  %v1234 = vpack.c.b16 %v664, %v658
  %v1235 = vpack.c.b16 %v671, %v665
  %v1236 = vpack.c.b16 %v672, %v666
  %v1237 = vpack.c.b16 %v673, %v667
  %v1238 = vpack.c.b16 %v674, %v668
  %v1239 = vpack.c.b16 %v675, %v669
  %v1240 = vpack.c.b16 %v676, %v670
  %v1241 = vpack.c.b16 %v683, %v677
  %v1242 = vpack.c.b16 %v684, %v678
  %v1243 = vpack.c.b16 %v685, %v679
  %v1244 = vpack.c.b16 %v686, %v680
  %v1245 = vpack.c.b16 %v687, %v681
  %v1246 = vpack.c.b16 %v688, %v682
  %v1247 = vpack.c.b16 %v695, %v689
  %v1248 = vpack.c.b16 %v696, %v690
  %v1249 = vpack.c.b16 %v697, %v691
  %v1250 = vpack.c.b16 %v698, %v692
  %v1251 = vpack.c.b16 %v699, %v693
  %v1252 = vpack.c.b16 %v700, %v694
  %v1253 = vpack.c.b16 %v707, %v701
  %v1254 = vpack.c.b16 %v708, %v702
  %v1255 = vpack.c.b16 %v709, %v703
  %v1256 = vpack.c.b16 %v710, %v704
  %v1257 = vpack.c.b16 %v711, %v705
  %v1258 = vpack.c.b16 %v712, %v706
  %v1259 = vpack.c.b16 %v719, %v713
  %v1260 = vpack.c.b16 %v720, %v714
  %v1261 = vpack.c.b16 %v721, %v715
  %v1262 = vpack.c.b16 %v722, %v716
  %v1263 = vpack.c.b16 %v723, %v717
  %v1264 = vpack.c.b16 %v724, %v718
  %v1265 = vpack.c.b16 %v731, %v725
  %v1266 = vpack.c.b16 %v732, %v726
  %v1267 = vpack.c.b16 %v733, %v727
  %v1268 = vpack.c.b16 %v734, %v728
  %v1269 = vpack.c.b16 %v735, %v729
  %v1270 = vpack.c.b16 %v736, %v730
  %v1271 = vpack.c.b16 %v743, %v737
  %v1272 = vpack.c.b16 %v744, %v738
  %v1273 = vpack.c.b16 %v745, %v739
  %v1274 = vpack.c.b16 %v746, %v740
  %v1275 = vpack.c.b16 %v747, %v741
  %v1276 = vpack.c.b16 %v748, %v742
  %v1277 = vpack.c.b16 %v755, %v749
  %v1278 = vpack.c.b16 %v756, %v750
  %v1279 = vpack.c.b16 %v757, %v751
  %v1280 = vpack.c.b16 %v758, %v752
  %v1281 = vpack.c.b16 %v759, %v753
  %v1282 = vpack.c.b16 %v760, %v754
  %v1283 = vpack.c.b16 %v767, %v761
  %v1284 = vpack.c.b16 %v768, %v762
  %v1285 = vpack.c.b16 %v769, %v763
  %v1286 = vpack.c.b16 %v770, %v764
  %v1287 = vpack.c.b16 %v771, %v765
  %v1288 = vpack.c.b16 %v772, %v766
  %v1289 = vpack.c.b16 %v779, %v773
  %v1290 = vpack.c.b16 %v780, %v774
  %v1291 = vpack.c.b16 %v781, %v775
  %v1292 = vpack.c.b16 %v782, %v776
  %v1293 = vpack.c.b16 %v783, %v777
  %v1294 = vpack.c.b16 %v784, %v778
  %v1295 = vpack.c.b16 %v791, %v785
  %v1296 = vpack.c.b16 %v792, %v786
  %v1297 = vpack.c.b16 %v793, %v787
  %v1298 = vpack.c.b16 %v794, %v788
  %v1299 = vpack.c.b16 %v795, %v789
  %v1300 = vpack.c.b16 %v796, %v790
  %v1301 = vpack.c.b16 %v803, %v797
  %v1302 = vpack.c.b16 %v804, %v798
  %v1303 = vpack.c.b16 %v805, %v799
  %v1304 = vpack.c.b16 %v806, %v800
  %v1305 = vpack.c.b16 %v807, %v801
  %v1306 = vpack.c.b16 %v808, %v802
  %v1307 = vpack.c.b16 %v815, %v809
  %v1308 = vpack.c.b16 %v816, %v810
  %v1309 = vpack.c.b16 %v817, %v811
  %v1310 = vpack.c.b16 %v818, %v812
  %v1311 = vpack.c.b16 %v819, %v813
  %v1312 = vpack.c.b16 %v820, %v814
  %v1313 = vpack.c.b16 %v827, %v821
  %v1314 = vpack.c.b16 %v828, %v822
  %v1315 = vpack.c.b16 %v829, %v823
  %v1316 = vpack.c.b16 %v830, %v824
  %v1317 = vpack.c.b16 %v831, %v825
  %v1318 = vpack.c.b16 %v832, %v826
  %v1319 = vpack.c.b16 %v839, %v833
  %v1320 = vpack.c.b16 %v840, %v834
  %v1321 = vpack.c.b16 %v841, %v835
  %v1322 = vpack.c.b16 %v842, %v836
  %v1323 = vpack.c.b16 %v843, %v837
  %v1324 = vpack.c.b16 %v844, %v838
  %v1325 = vpack.c.b16 %v851, %v845
  %v1326 = vpack.c.b16 %v852, %v846
  %v1327 = vpack.c.b16 %v853, %v847
  %v1328 = vpack.c.b16 %v854, %v848
  %v1329 = vpack.c.b16 %v855, %v849
  %v1330 = vpack.c.b16 %v856, %v850
  %v1331 = vpack.c.b16 %v863, %v857
  %v1332 = vpack.c.b16 %v864, %v858
  %v1333 = vpack.c.b16 %v865, %v859
  %v1334 = vpack.c.b16 %v866, %v860
  %v1335 = vpack.c.b16 %v867, %v861
  %v1336 = vpack.c.b16 %v868, %v862
  %v1337 = vpack.c.b16 %v875, %v869
  %v1338 = vpack.c.b16 %v876, %v870
  %v1339 = vpack.c.b16 %v877, %v871
  %v1340 = vpack.c.b16 %v878, %v872
  %v1341 = vpack.c.b16 %v879, %v873
  %v1342 = vpack.c.b16 %v880, %v874
  %v1343 = vpack.c.b16 %v887, %v881
  %v1344 = vpack.c.b16 %v888, %v882
  %v1345 = vpack.c.b16 %v889, %v883
  %v1346 = vpack.c.b16 %v890, %v884
  %v1347 = vpack.c.b16 %v891, %v885
  %v1348 = vpack.c.b16 %v892, %v886
  %v1349 = vpack.c.b16 %v899, %v893
  %v1350 = vpack.c.b16 %v900, %v894
  %v1351 = vpack.c.b16 %v901, %v895
  %v1352 = vpack.c.b16 %v902, %v896
  %v1353 = vpack.c.b16 %v903, %v897
  %v1354 = vpack.c.b16 %v904, %v898
  %v1355 = vpack.c.b16 %v911, %v905
  %v1356 = vpack.c.b16 %v912, %v906
  %v1357 = vpack.c.b16 %v913, %v907
  %v1358 = vpack.c.b16 %v914, %v908
  %v1359 = vpack.c.b16 %v915, %v909
  %v1360 = vpack.c.b16 %v916, %v910
  %v1361 = vpack.c.b16 %v923, %v917
  %v1362 = vpack.c.b16 %v924, %v918
  %v1363 = vpack.c.b16 %v925, %v919
  %v1364 = vpack.c.b16 %v926, %v920
  %v1365 = vpack.c.b16 %v927, %v921
  %v1366 = vpack.c.b16 %v928, %v922
  %v1367 = vpack.c.b16 %v935, %v929
  %v1368 = vpack.c.b16 %v936, %v930
  %v1369 = vpack.c.b16 %v937, %v931
  %v1370 = vpack.c.b16 %v938, %v932
  %v1371 = vpack.c.b16 %v939, %v933
  %v1372 = vpack.c.b16 %v940, %v934
  %v1373 = vpack.c.b16 %v947, %v941
  %v1374 = vpack.c.b16 %v948, %v942
  %v1375 = vpack.c.b16 %v949, %v943
  %v1376 = vpack.c.b16 %v950, %v944
  %v1377 = vpack.c.b16 %v951, %v945
  %v1378 = vpack.c.b16 %v952, %v946
  %v1379 = vpack.c.b16 %v959, %v953
  %v1380 = vpack.c.b16 %v960, %v954
  %v1381 = vpack.c.b16 %v961, %v955
  %v1382 = vpack.c.b16 %v962, %v956
  %v1383 = vpack.c.b16 %v963, %v957
  %v1384 = vpack.c.b16 %v964, %v958
  %v1385 = vpack.c.b16 %v971, %v965
  %v1386 = vpack.c.b16 %v972, %v966
  %v1387 = vpack.c.b16 %v973, %v967
  %v1388 = vpack.c.b16 %v974, %v968
  %v1389 = vpack.c.b16 %v975, %v969
  %v1390 = vpack.c.b16 %v976, %v970
  %v1391 = vpack.c.b16 %v983, %v977
  %v1392 = vpack.c.b16 %v984, %v978
  %v1393 = vpack.c.b16 %v985, %v979
  %v1394 = vpack.c.b16 %v986, %v980
  %v1395 = vpack.c.b16 %v987, %v981
  %v1396 = vpack.c.b16 %v988, %v982
  %v1397 = vpack.c.b16 %v995, %v989
  %v1398 = vpack.c.b16 %v996, %v990
  %v1399 = vpack.c.b16 %v997, %v991
  %v1400 = vpack.c.b16 %v998, %v992
  %v1401 = vpack.c.b16 %v999, %v993
  %v1402 = vpack.c.b16 %v1000, %v994
  %v1403 = vpack.c.b16 %v1007, %v1001
  %v1404 = vpack.c.b16 %v1008, %v1002
  %v1405 = vpack.c.b16 %v1009, %v1003
  %v1406 = vpack.c.b16 %v1010, %v1004
  %v1407 = vpack.c.b16 %v1011, %v1005
  %v1408 = vpack.c.b16 %v1012, %v1006
  %v1409 = vpack.c.b16 %v1019, %v1013
  %v1410 = vpack.c.b16 %v1020, %v1014
  %v1411 = vpack.c.b16 %v1021, %v1015
  %v1412 = vpack.c.b16 %v1022, %v1016
  %v1413 = vpack.c.b16 %v1023, %v1017
  %v1414 = vpack.c.b16 %v1024, %v1018
  %v1415 = vpack.c.b16 %v1031, %v1025
  %v1416 = vpack.c.b16 %v1032, %v1026
  %v1417 = vpack.c.b16 %v1033, %v1027
  %v1418 = vpack.c.b16 %v1034, %v1028
  %v1419 = vpack.c.b16 %v1035, %v1029
  %v1420 = vpack.c.b16 %v1036, %v1030
  %v1421 = vpack.c.b16 %v1043, %v1037
  %v1422 = vpack.c.b16 %v1044, %v1038
  %v1423 = vpack.c.b16 %v1045, %v1039
  %v1424 = vpack.c.b16 %v1046, %v1040
  %v1425 = vpack.c.b16 %v1047, %v1041
  %v1426 = vpack.c.b16 %v1048, %v1042
  %v1427 = vpack.c.b16 %v1055, %v1049
  %v1428 = vpack.c.b16 %v1056, %v1050
  %v1429 = vpack.c.b16 %v1057, %v1051
  %v1430 = vpack.c.b16 %v1058, %v1052
  %v1431 = vpack.c.b16 %v1059, %v1053
  %v1432 = vpack.c.b16 %v1060, %v1054
  %v1433 = vpack.c.b16 %v1067, %v1061
  %v1434 = vpack.c.b16 %v1068, %v1062
  %v1435 = vpack.c.b16 %v1069, %v1063
  %v1436 = vpack.c.b16 %v1070, %v1064
  %v1437 = vpack.c.b16 %v1071, %v1065
  %v1438 = vpack.c.b16 %v1072, %v1066
  %v1439 = vpack.c.b16 %v1079, %v1073
  %v1440 = vpack.c.b16 %v1080, %v1074
  %v1441 = vpack.c.b16 %v1081, %v1075
  %v1442 = vpack.c.b16 %v1082, %v1076
  %v1443 = vpack.c.b16 %v1083, %v1077
  %v1444 = vpack.c.b16 %v1084, %v1078
  %v1445 = vpack.c.b16 %v1091, %v1085
  %v1446 = vpack.c.b16 %v1092, %v1086
  %v1447 = vpack.c.b16 %v1093, %v1087
  %v1448 = vpack.c.b16 %v1094, %v1088
  %v1449 = vpack.c.b16 %v1095, %v1089
  %v1450 = vpack.c.b16 %v1096, %v1090
  %v1451 = vpack.c.b16 %v1103, %v1097
  %v1452 = vpack.c.b16 %v1104, %v1098
  %v1453 = vpack.c.b16 %v1105, %v1099
  %v1454 = vpack.c.b16 %v1106, %v1100
  %v1455 = vpack.c.b16 %v1107, %v1101
  %v1456 = vpack.c.b16 %v1108, %v1102
  %v1457 = vpack.c.b16 %v1115, %v1109
  %v1458 = vpack.c.b16 %v1116, %v1110
  %v1459 = vpack.c.b16 %v1117, %v1111
  %v1460 = vpack.c.b16 %v1118, %v1112
  %v1461 = vpack.c.b16 %v1119, %v1113
  %v1462 = vpack.c.b16 %v1120, %v1114
  %v1463 = vpack.c.b16 %v1127, %v1121
  %v1464 = vpack.c.b16 %v1128, %v1122
  %v1465 = vpack.c.b16 %v1129, %v1123
  %v1466 = vpack.c.b16 %v1130, %v1124
  %v1467 = vpack.c.b16 %v1131, %v1125
  %v1468 = vpack.c.b16 %v1132, %v1126
  %v1469 = vpack.c.b16 %v1139, %v1133
  %v1470 = vpack.c.b16 %v1140, %v1134
  %v1471 = vpack.c.b16 %v1141, %v1135
  %v1472 = vpack.c.b16 %v1142, %v1136
  %v1473 = vpack.c.b16 %v1143, %v1137
  %v1474 = vpack.c.b16 %v1144, %v1138
  %v1475 = vpack.c.b16 %v1151, %v1145
  %v1476 = vpack.c.b16 %v1152, %v1146
  %v1477 = vpack.c.b16 %v1153, %v1147
  %v1478 = vpack.c.b16 %v1154, %v1148
  %v1479 = vpack.c.b16 %v1155, %v1149
  %v1480 = vpack.c.b16 %v1156, %v1150
  %v1481 = vpack.c.b16 %v1163, %v1157
  %v1482 = vpack.c.b16 %v1164, %v1158
  %v1483 = vpack.c.b16 %v1165, %v1159
  %v1484 = vpack.c.b16 %v1166, %v1160
  %v1485 = vpack.c.b16 %v1167, %v1161
  %v1486 = vpack.c.b16 %v1168, %v1162
  %v1487 = vpack.c.b16 %v1175, %v1169
  %v1488 = vpack.c.b16 %v1176, %v1170
  %v1489 = vpack.c.b16 %v1177, %v1171
  %v1490 = vpack.c.b16 %v1178, %v1172
  %v1491 = vpack.c.b16 %v1179, %v1173
  %v1492 = vpack.c.b16 %v1180, %v1174
  %v1493 = vpack.c.b16 %v1187, %v1181
  %v1494 = vpack.c.b16 %v1188, %v1182
  %v1495 = vpack.c.b16 %v1189, %v1183
  %v1496 = vpack.c.b16 %v1190, %v1184
  %v1497 = vpack.c.b16 %v1191, %v1185
  %v1498 = vpack.c.b16 %v1192, %v1186
  %v1499 = vpack.c.b16 %v1199, %v1193
  %v1500 = vpack.c.b16 %v1200, %v1194
  %v1501 = vpack.c.b16 %v1201, %v1195
  %v1502 = vpack.c.b16 %v1202, %v1196
  %v1503 = vpack.c.b16 %v1203, %v1197
  %v1504 = vpack.c.b16 %v1204, %v1198
  %v1505 = vpack.c.b16 %v1211, %v1205
  %v1506 = vpack.c.b16 %v1212, %v1206
  %v1507 = vpack.c.b16 %v1213, %v1207
  %v1508 = vpack.c.b16 %v1214, %v1208
  %v1509 = vpack.c.b16 %v1215, %v1209
  %v1510 = vpack.c.b16 %v1216, %v1210
  %v1511 = vpack.c.b16 %v1223, %v1217
  %v1512 = vpack.c.b16 %v1224, %v1218
  %v1513 = vpack.c.b16 %v1225, %v1219
  %v1514 = vpack.c.b16 %v1226, %v1220
  %v1515 = vpack.c.b16 %v1227, %v1221
  %v1516 = vpack.c.b16 %v1228, %v1222
  %1805 = vmatprep.subr.bf16.mxu0 %v1230
  %1806 = vmatpush1.bf16.msra.mxu0 %v1229
  %1807 = vmatprep.subr.bf16.mxu0 %v1236
  %1808 = vmatpush1.bf16.msra.mxu0 %v1235
  %1809 = vmatprep.subr.bf16.mxu0 %v1242
  %1810 = vmatpush1.bf16.msra.mxu0 %v1241
  %1811 = vmatprep.subr.bf16.mxu0 %v1248
  %1812 = vmatpush1.bf16.msra.mxu0 %v1247
  %1813 = vmatprep.subr.bf16.mxu0 %v1254
  %1814 = vmatpush1.bf16.msra.mxu0 %v1253
  %1815 = vmatprep.subr.bf16.mxu0 %v1260
  %1816 = vmatpush1.bf16.msra.mxu0 %v1259
  %1817 = vmatprep.subr.bf16.mxu0 %v1266
  %1818 = vmatpush1.bf16.msra.mxu0 %v1265
  %1819 = vmatprep.subr.bf16.mxu0 %v1272
  %1820 = vmatpush1.bf16.msra.mxu0 %v1271
  %1821 = vmatprep.subr.bf16.mxu0 %v1278
  %1822 = vmatpush1.bf16.msra.mxu0 %v1277
  %1823 = vmatprep.subr.bf16.mxu0 %v1284
  %1824 = vmatpush1.bf16.msra.mxu0 %v1283
  %1825 = vmatprep.subr.bf16.mxu0 %v1290
  %1826 = vmatpush1.bf16.msra.mxu0 %v1289
  %1827 = vmatprep.subr.bf16.mxu0 %v1296
  %1828 = vmatpush1.bf16.msra.mxu0 %v1295
  %1829 = vmatprep.subr.bf16.mxu0 %v1302
  %1830 = vmatpush1.bf16.msra.mxu0 %v1301
  %1831 = vmatprep.subr.bf16.mxu0 %v1308
  %1832 = vmatpush1.bf16.msra.mxu0 %v1307
  %1833 = vmatprep.subr.bf16.mxu0 %v1314
  %1834 = vmatpush1.bf16.msra.mxu0 %v1313
  %1835 = vmatprep.subr.bf16.mxu0 %v1320
  %1836 = vmatpush1.bf16.msra.mxu0 %v1319
  %1837 = vmatprep.mubr.bf16.mxu0 %v354
  %1838 = vmatmul.mubr.bf16.gmra.mrb[0].mxu0 %v353
  %v1839 = vpop.f32.mrb[0].mxu0
  %v1840 = vadd.f32 %v317, %v1839
  %v1841 = vpop.f32.mrb[0].mxu0
  %v1842 = vadd.f32 %v321, %v1841
  %v1843 = vpop.f32.mrb[0].mxu0
  %v1844 = vpop.f32.mrb[0].mxu0
  %1845 = vdwg.mxu0
  %1846 = vmatprep.subr.bf16.mxu0 %v1326
  %1847 = vmatpush1.bf16.msra.mxu0 %v1325
  %1848 = vmatprep.subr.bf16.mxu0 %v1332
  %1849 = vmatpush1.bf16.msra.mxu0 %v1331
  %1850 = vmatprep.subr.bf16.mxu0 %v1338
  %1851 = vmatpush1.bf16.msra.mxu0 %v1337
  %1852 = vmatprep.subr.bf16.mxu0 %v1344
  %1853 = vmatpush1.bf16.msra.mxu0 %v1343
  %1854 = vmatprep.subr.bf16.mxu0 %v1350
  %1855 = vmatpush1.bf16.msra.mxu0 %v1349
  %1856 = vmatprep.subr.bf16.mxu0 %v1356
  %1857 = vmatpush1.bf16.msra.mxu0 %v1355
  %1858 = vmatprep.subr.bf16.mxu0 %v1362
  %1859 = vmatpush1.bf16.msra.mxu0 %v1361
  %1860 = vmatprep.subr.bf16.mxu0 %v1368
  %1861 = vmatpush1.bf16.msra.mxu0 %v1367
  %1862 = vmatprep.subr.bf16.mxu0 %v1374
  %1863 = vmatpush1.bf16.msra.mxu0 %v1373
  %1864 = vmatprep.subr.bf16.mxu0 %v1380
  %1865 = vmatpush1.bf16.msra.mxu0 %v1379
  %1866 = vmatprep.subr.bf16.mxu0 %v1386
  %1867 = vmatpush1.bf16.msra.mxu0 %v1385
  %1868 = vmatprep.subr.bf16.mxu0 %v1392
  %1869 = vmatpush1.bf16.msra.mxu0 %v1391
  %1870 = vmatprep.subr.bf16.mxu0 %v1398
  %1871 = vmatpush1.bf16.msra.mxu0 %v1397
  %1872 = vmatprep.subr.bf16.mxu0 %v1404
  %1873 = vmatpush1.bf16.msra.mxu0 %v1403
  %1874 = vmatprep.subr.bf16.mxu0 %v1410
  %1875 = vmatpush1.bf16.msra.mxu0 %v1409
  %1876 = vmatprep.subr.bf16.mxu0 %v1416
  %1877 = vmatpush1.bf16.msra.mxu0 %v1415
  %1878 = vmatprep.mubr.bf16.mxu0 %v356
  %1879 = vmatmul.mubr.bf16.gmra.mrb[0].mxu0 %v355
  %v1880 = vpop.f32.mrb[0].mxu0
  %v1881 = vadd.f32 %v1840, %v1880
  %v1882 = vpop.f32.mrb[0].mxu0
  %v1883 = vadd.f32 %v1842, %v1882
  %v1884 = vpop.f32.mrb[0].mxu0
  %v1885 = vpop.f32.mrb[0].mxu0
  %1886 = vdwg.mxu0
  %1887 = vmatprep.subr.bf16.mxu0 %v1422
  %1888 = vmatpush1.bf16.msra.mxu0 %v1421
  %1889 = vmatprep.subr.bf16.mxu0 %v1428
  %1890 = vmatpush1.bf16.msra.mxu0 %v1427
  %1891 = vmatprep.subr.bf16.mxu0 %v1434
  %1892 = vmatpush1.bf16.msra.mxu0 %v1433
  %1893 = vmatprep.subr.bf16.mxu0 %v1440
  %1894 = vmatpush1.bf16.msra.mxu0 %v1439
  %1895 = vmatprep.subr.bf16.mxu0 %v1446
  %1896 = vmatpush1.bf16.msra.mxu0 %v1445
  %1897 = vmatprep.subr.bf16.mxu0 %v1452
  %1898 = vmatpush1.bf16.msra.mxu0 %v1451
  %1899 = vmatprep.subr.bf16.mxu0 %v1458
  %1900 = vmatpush1.bf16.msra.mxu0 %v1457
  %1901 = vmatprep.subr.bf16.mxu0 %v1464
  %1902 = vmatpush1.bf16.msra.mxu0 %v1463
  %1903 = vmatprep.subr.bf16.mxu0 %v1470
  %1904 = vmatpush1.bf16.msra.mxu0 %v1469
  %1905 = vmatprep.subr.bf16.mxu0 %v1476
  %1906 = vmatpush1.bf16.msra.mxu0 %v1475
  %1907 = vmatprep.subr.bf16.mxu0 %v1482
  %1908 = vmatpush1.bf16.msra.mxu0 %v1481
  %1909 = vmatprep.subr.bf16.mxu0 %v1488
  %1910 = vmatpush1.bf16.msra.mxu0 %v1487
  %1911 = vmatprep.subr.bf16.mxu0 %v1494
  %1912 = vmatpush1.bf16.msra.mxu0 %v1493
  %1913 = vmatprep.subr.bf16.mxu0 %v1500
  %1914 = vmatpush1.bf16.msra.mxu0 %v1499
  %1915 = vmatprep.subr.bf16.mxu0 %v1506
  %1916 = vmatpush1.bf16.msra.mxu0 %v1505
  %1917 = vmatprep.subr.bf16.mxu0 %v1512
  %1918 = vmatpush1.bf16.msra.mxu0 %v1511
  %1919 = vmatprep.mubr.bf16.mxu0 %v358
  %1920 = vmatmul.mubr.bf16.gmra.mrb[0].mxu0 %v357
  %v1921 = vpop.f32.mrb[0].mxu0
  %v1922 = vadd.f32 %v1881, %v1921
  %v1923 = vpop.f32.mrb[0].mxu0
  %v1924 = vadd.f32 %v1883, %v1923
  %v1925 = vpop.f32.mrb[0].mxu0
  %v1926 = vpop.f32.mrb[0].mxu0
  %1927 = vdwg.mxu0
  %1928 = vmatprep.subr.bf16.mxu0 %v1232
  %1929 = vmatpush1.bf16.msra.mxu0 %v1231
  %1930 = vmatprep.subr.bf16.mxu0 %v1238
  %1931 = vmatpush1.bf16.msra.mxu0 %v1237
  %1932 = vmatprep.subr.bf16.mxu0 %v1244
  %1933 = vmatpush1.bf16.msra.mxu0 %v1243
  %1934 = vmatprep.subr.bf16.mxu0 %v1250
  %1935 = vmatpush1.bf16.msra.mxu0 %v1249
  %1936 = vmatprep.subr.bf16.mxu0 %v1256
  %1937 = vmatpush1.bf16.msra.mxu0 %v1255
  %1938 = vmatprep.subr.bf16.mxu0 %v1262
  %1939 = vmatpush1.bf16.msra.mxu0 %v1261
  %1940 = vmatprep.subr.bf16.mxu0 %v1268
  %1941 = vmatpush1.bf16.msra.mxu0 %v1267
  %1942 = vmatprep.subr.bf16.mxu0 %v1274
  %1943 = vmatpush1.bf16.msra.mxu0 %v1273
  %1944 = vmatprep.subr.bf16.mxu0 %v1280
  %1945 = vmatpush1.bf16.msra.mxu0 %v1279
  %1946 = vmatprep.subr.bf16.mxu0 %v1286
  %1947 = vmatpush1.bf16.msra.mxu0 %v1285
  %1948 = vmatprep.subr.bf16.mxu0 %v1292
  %1949 = vmatpush1.bf16.msra.mxu0 %v1291
  %1950 = vmatprep.subr.bf16.mxu0 %v1298
  %1951 = vmatpush1.bf16.msra.mxu0 %v1297
  %1952 = vmatprep.subr.bf16.mxu0 %v1304
  %1953 = vmatpush1.bf16.msra.mxu0 %v1303
  %1954 = vmatprep.subr.bf16.mxu0 %v1310
  %1955 = vmatpush1.bf16.msra.mxu0 %v1309
  %1956 = vmatprep.subr.bf16.mxu0 %v1316
  %1957 = vmatpush1.bf16.msra.mxu0 %v1315
  %1958 = vmatprep.subr.bf16.mxu0 %v1322
  %1959 = vmatpush1.bf16.msra.mxu0 %v1321
  %1960 = vmatprep.mubr.bf16.mxu0 %v354
  %1961 = vmatmul.mubr.bf16.gmra.mrb[0].mxu0 %v353
  %v1962 = vpop.f32.mrb[0].mxu0
  %v1963 = vadd.f32 %v325, %v1962
  %v1964 = vpop.f32.mrb[0].mxu0
  %v1965 = vadd.f32 %v329, %v1964
  %v1966 = vpop.f32.mrb[0].mxu0
  %v1967 = vpop.f32.mrb[0].mxu0
  %1968 = vdwg.mxu0
  %1969 = vmatprep.subr.bf16.mxu0 %v1328
  %1970 = vmatpush1.bf16.msra.mxu0 %v1327
  %1971 = vmatprep.subr.bf16.mxu0 %v1334
  %1972 = vmatpush1.bf16.msra.mxu0 %v1333
  %1973 = vmatprep.subr.bf16.mxu0 %v1340
  %1974 = vmatpush1.bf16.msra.mxu0 %v1339
  %1975 = vmatprep.subr.bf16.mxu0 %v1346
  %1976 = vmatpush1.bf16.msra.mxu0 %v1345
  %1977 = vmatprep.subr.bf16.mxu0 %v1352
  %1978 = vmatpush1.bf16.msra.mxu0 %v1351
  %1979 = vmatprep.subr.bf16.mxu0 %v1358
  %1980 = vmatpush1.bf16.msra.mxu0 %v1357
  %1981 = vmatprep.subr.bf16.mxu0 %v1364
  %1982 = vmatpush1.bf16.msra.mxu0 %v1363
  %1983 = vmatprep.subr.bf16.mxu0 %v1370
  %1984 = vmatpush1.bf16.msra.mxu0 %v1369
  %1985 = vmatprep.subr.bf16.mxu0 %v1376
  %1986 = vmatpush1.bf16.msra.mxu0 %v1375
  %1987 = vmatprep.subr.bf16.mxu0 %v1382
  %1988 = vmatpush1.bf16.msra.mxu0 %v1381
  %1989 = vmatprep.subr.bf16.mxu0 %v1388
  %1990 = vmatpush1.bf16.msra.mxu0 %v1387
  %1991 = vmatprep.subr.bf16.mxu0 %v1394
  %1992 = vmatpush1.bf16.msra.mxu0 %v1393
  %1993 = vmatprep.subr.bf16.mxu0 %v1400
  %1994 = vmatpush1.bf16.msra.mxu0 %v1399
  %1995 = vmatprep.subr.bf16.mxu0 %v1406
  %1996 = vmatpush1.bf16.msra.mxu0 %v1405
  %1997 = vmatprep.subr.bf16.mxu0 %v1412
  %1998 = vmatpush1.bf16.msra.mxu0 %v1411
  %1999 = vmatprep.subr.bf16.mxu0 %v1418
  %2000 = vmatpush1.bf16.msra.mxu0 %v1417
  %2001 = vmatprep.mubr.bf16.mxu0 %v356
  %2002 = vmatmul.mubr.bf16.gmra.mrb[0].mxu0 %v355
  %v2003 = vpop.f32.mrb[0].mxu0
  %v2004 = vadd.f32 %v1963, %v2003
  %v2005 = vpop.f32.mrb[0].mxu0
  %v2006 = vadd.f32 %v1965, %v2005
  %v2007 = vpop.f32.mrb[0].mxu0
  %v2008 = vpop.f32.mrb[0].mxu0
  %2009 = vdwg.mxu0
  %2010 = vmatprep.subr.bf16.mxu0 %v1424
  %2011 = vmatpush1.bf16.msra.mxu0 %v1423
  %2012 = vmatprep.subr.bf16.mxu0 %v1430
  %2013 = vmatpush1.bf16.msra.mxu0 %v1429
  %2014 = vmatprep.subr.bf16.mxu0 %v1436
  %2015 = vmatpush1.bf16.msra.mxu0 %v1435
  %2016 = vmatprep.subr.bf16.mxu0 %v1442
  %2017 = vmatpush1.bf16.msra.mxu0 %v1441
  %2018 = vmatprep.subr.bf16.mxu0 %v1448
  %2019 = vmatpush1.bf16.msra.mxu0 %v1447
  %2020 = vmatprep.subr.bf16.mxu0 %v1454
  %2021 = vmatpush1.bf16.msra.mxu0 %v1453
  %2022 = vmatprep.subr.bf16.mxu0 %v1460
  %2023 = vmatpush1.bf16.msra.mxu0 %v1459
  %2024 = vmatprep.subr.bf16.mxu0 %v1466
  %2025 = vmatpush1.bf16.msra.mxu0 %v1465
  %2026 = vmatprep.subr.bf16.mxu0 %v1472
  %2027 = vmatpush1.bf16.msra.mxu0 %v1471
  %2028 = vmatprep.subr.bf16.mxu0 %v1478
  %2029 = vmatpush1.bf16.msra.mxu0 %v1477
  %2030 = vmatprep.subr.bf16.mxu0 %v1484
  %2031 = vmatpush1.bf16.msra.mxu0 %v1483
  %2032 = vmatprep.subr.bf16.mxu0 %v1490
  %2033 = vmatpush1.bf16.msra.mxu0 %v1489
  %2034 = vmatprep.subr.bf16.mxu0 %v1496
  %2035 = vmatpush1.bf16.msra.mxu0 %v1495
  %2036 = vmatprep.subr.bf16.mxu0 %v1502
  %2037 = vmatpush1.bf16.msra.mxu0 %v1501
  %2038 = vmatprep.subr.bf16.mxu0 %v1508
  %2039 = vmatpush1.bf16.msra.mxu0 %v1507
  %2040 = vmatprep.subr.bf16.mxu0 %v1514
  %2041 = vmatpush1.bf16.msra.mxu0 %v1513
  %2042 = vmatprep.mubr.bf16.mxu0 %v358
  %2043 = vmatmul.mubr.bf16.gmra.mrb[0].mxu0 %v357
  %v2044 = vpop.f32.mrb[0].mxu0
  %v2045 = vadd.f32 %v2004, %v2044
  %v2046 = vpop.f32.mrb[0].mxu0
  %v2047 = vadd.f32 %v2006, %v2046
  %v2048 = vpop.f32.mrb[0].mxu0
  %v2049 = vpop.f32.mrb[0].mxu0
  %2050 = vdwg.mxu0
  %2051 = vmatprep.subr.bf16.mxu0 %v1234
  %2052 = vmatpush1.bf16.msra.mxu0 %v1233
  %2053 = vmatprep.subr.bf16.mxu0 %v1240
  %2054 = vmatpush1.bf16.msra.mxu0 %v1239
  %2055 = vmatprep.subr.bf16.mxu0 %v1246
  %2056 = vmatpush1.bf16.msra.mxu0 %v1245
  %2057 = vmatprep.subr.bf16.mxu0 %v1252
  %2058 = vmatpush1.bf16.msra.mxu0 %v1251
  %2059 = vmatprep.subr.bf16.mxu0 %v1258
  %2060 = vmatpush1.bf16.msra.mxu0 %v1257
  %2061 = vmatprep.subr.bf16.mxu0 %v1264
  %2062 = vmatpush1.bf16.msra.mxu0 %v1263
  %2063 = vmatprep.subr.bf16.mxu0 %v1270
  %2064 = vmatpush1.bf16.msra.mxu0 %v1269
  %2065 = vmatprep.subr.bf16.mxu0 %v1276
  %2066 = vmatpush1.bf16.msra.mxu0 %v1275
  %2067 = vmatprep.subr.bf16.mxu0 %v1282
  %2068 = vmatpush1.bf16.msra.mxu0 %v1281
  %2069 = vmatprep.subr.bf16.mxu0 %v1288
  %2070 = vmatpush1.bf16.msra.mxu0 %v1287
  %2071 = vmatprep.subr.bf16.mxu0 %v1294
  %2072 = vmatpush1.bf16.msra.mxu0 %v1293
  %2073 = vmatprep.subr.bf16.mxu0 %v1300
  %2074 = vmatpush1.bf16.msra.mxu0 %v1299
  %2075 = vmatprep.subr.bf16.mxu0 %v1306
  %2076 = vmatpush1.bf16.msra.mxu0 %v1305
  %2077 = vmatprep.subr.bf16.mxu0 %v1312
  %2078 = vmatpush1.bf16.msra.mxu0 %v1311
  %2079 = vmatprep.subr.bf16.mxu0 %v1318
  %2080 = vmatpush1.bf16.msra.mxu0 %v1317
  %2081 = vmatprep.subr.bf16.mxu0 %v1324
  %2082 = vmatpush1.bf16.msra.mxu0 %v1323
  %2083 = vmatprep.mubr.bf16.mxu0 %v354
  %2084 = vmatmul.mubr.bf16.gmra.mrb[0].mxu0 %v353
  %v2085 = vpop.f32.mrb[0].mxu0
  %v2086 = vadd.f32 %v333, %v2085
  %v2087 = vpop.f32.mrb[0].mxu0
  %v2088 = vadd.f32 %v337, %v2087
  %v2089 = vpop.f32.mrb[0].mxu0
  %v2090 = vpop.f32.mrb[0].mxu0
  %2091 = vdwg.mxu0
  %2092 = vmatprep.subr.bf16.mxu0 %v1330
  %2093 = vmatpush1.bf16.msra.mxu0 %v1329
  %2094 = vmatprep.subr.bf16.mxu0 %v1336
  %2095 = vmatpush1.bf16.msra.mxu0 %v1335
  %2096 = vmatprep.subr.bf16.mxu0 %v1342
  %2097 = vmatpush1.bf16.msra.mxu0 %v1341
  %2098 = vmatprep.subr.bf16.mxu0 %v1348
  %2099 = vmatpush1.bf16.msra.mxu0 %v1347
  %2100 = vmatprep.subr.bf16.mxu0 %v1354
  %2101 = vmatpush1.bf16.msra.mxu0 %v1353
  %2102 = vmatprep.subr.bf16.mxu0 %v1360
  %2103 = vmatpush1.bf16.msra.mxu0 %v1359
  %2104 = vmatprep.subr.bf16.mxu0 %v1366
  %2105 = vmatpush1.bf16.msra.mxu0 %v1365
  %2106 = vmatprep.subr.bf16.mxu0 %v1372
  %2107 = vmatpush1.bf16.msra.mxu0 %v1371
  %2108 = vmatprep.subr.bf16.mxu0 %v1378
  %2109 = vmatpush1.bf16.msra.mxu0 %v1377
  %2110 = vmatprep.subr.bf16.mxu0 %v1384
  %2111 = vmatpush1.bf16.msra.mxu0 %v1383
  %2112 = vmatprep.subr.bf16.mxu0 %v1390
  %2113 = vmatpush1.bf16.msra.mxu0 %v1389
  %2114 = vmatprep.subr.bf16.mxu0 %v1396
  %2115 = vmatpush1.bf16.msra.mxu0 %v1395
  %2116 = vmatprep.subr.bf16.mxu0 %v1402
  %2117 = vmatpush1.bf16.msra.mxu0 %v1401
  %2118 = vmatprep.subr.bf16.mxu0 %v1408
  %2119 = vmatpush1.bf16.msra.mxu0 %v1407
  %2120 = vmatprep.subr.bf16.mxu0 %v1414
  %2121 = vmatpush1.bf16.msra.mxu0 %v1413
  %2122 = vmatprep.subr.bf16.mxu0 %v1420
  %2123 = vmatpush1.bf16.msra.mxu0 %v1419
  %2124 = vmatprep.mubr.bf16.mxu0 %v356
  %2125 = vmatmul.mubr.bf16.gmra.mrb[0].mxu0 %v355
  %v2126 = vpop.f32.mrb[0].mxu0
  %v2127 = vadd.f32 %v2086, %v2126
  %v2128 = vpop.f32.mrb[0].mxu0
  %v2129 = vadd.f32 %v2088, %v2128
  %v2130 = vpop.f32.mrb[0].mxu0
  %v2131 = vpop.f32.mrb[0].mxu0
  %2132 = vdwg.mxu0
  %2133 = vmatprep.subr.bf16.mxu0 %v1426
  %2134 = vmatpush1.bf16.msra.mxu0 %v1425
  %2135 = vmatprep.subr.bf16.mxu0 %v1432
  %2136 = vmatpush1.bf16.msra.mxu0 %v1431
  %2137 = vmatprep.subr.bf16.mxu0 %v1438
  %2138 = vmatpush1.bf16.msra.mxu0 %v1437
  %2139 = vmatprep.subr.bf16.mxu0 %v1444
  %2140 = vmatpush1.bf16.msra.mxu0 %v1443
  %2141 = vmatprep.subr.bf16.mxu0 %v1450
  %2142 = vmatpush1.bf16.msra.mxu0 %v1449
  %2143 = vmatprep.subr.bf16.mxu0 %v1456
  %2144 = vmatpush1.bf16.msra.mxu0 %v1455
  %2145 = vmatprep.subr.bf16.mxu0 %v1462
  %2146 = vmatpush1.bf16.msra.mxu0 %v1461
  %2147 = vmatprep.subr.bf16.mxu0 %v1468
  %2148 = vmatpush1.bf16.msra.mxu0 %v1467
  %2149 = vmatprep.subr.bf16.mxu0 %v1474
  %2150 = vmatpush1.bf16.msra.mxu0 %v1473
  %2151 = vmatprep.subr.bf16.mxu0 %v1480
  %2152 = vmatpush1.bf16.msra.mxu0 %v1479
  %2153 = vmatprep.subr.bf16.mxu0 %v1486
  %2154 = vmatpush1.bf16.msra.mxu0 %v1485
  %2155 = vmatprep.subr.bf16.mxu0 %v1492
  %2156 = vmatpush1.bf16.msra.mxu0 %v1491
  %2157 = vmatprep.subr.bf16.mxu0 %v1498
  %2158 = vmatpush1.bf16.msra.mxu0 %v1497
  %2159 = vmatprep.subr.bf16.mxu0 %v1504
  %2160 = vmatpush1.bf16.msra.mxu0 %v1503
  %2161 = vmatprep.subr.bf16.mxu0 %v1510
  %2162 = vmatpush1.bf16.msra.mxu0 %v1509
  %2163 = vmatprep.subr.bf16.mxu0 %v1516
  %2164 = vmatpush1.bf16.msra.mxu0 %v1515
  %2165 = vmatprep.mubr.bf16.mxu0 %v358
  %2166 = vmatmul.mubr.bf16.gmra.mrb[0].mxu0 %v357
  %v2167 = vpop.f32.mrb[0].mxu0
  %v2168 = vadd.f32 %v2127, %v2167
  %v2169 = vpop.f32.mrb[0].mxu0
  %v2170 = vadd.f32 %v2129, %v2169
  %v2171 = vpop.f32.mrb[0].mxu0
  %v2172 = vpop.f32.mrb[0].mxu0
  %2173 = vdwg.mxu0
  %v2174 = vtanh.pop %v1922
  %v2175 = vtanh.pop %v1924
  %v2176 = vtanh.pop %v2045
  %v2177 = vtanh.pop %v2047
  %v2178 = vtanh.pop %v2168
  %v2179 = vtanh.pop %v2170
  %v2180 = vpack.c.bf16 %v2174, %v2174
  %v2181 = vpack.c.bf16 %v2175, %v2175
  %v2182 = vpack.c.bf16 %v2176, %v2176
  %v2183 = vpack.c.bf16 %v2177, %v2177
  %v2184 = vpack.c.bf16 %v2178, %v2178
  %v2185 = vpack.c.bf16 %v2179, %v2179
  %v2186 = vld [vmem:[%s3] sm:$0xf]
  %v2187 = vld [vmem:[%s3 + $0x4] sm:$0xf]
  %v2188 = vld [vmem:[%s3 + $0x8] sm:$0xf]
  %v2189 = vld [vmem:[%s3 + $0xc] sm:$0xf]
  %v2190 = vld [vmem:[%s3 + $0x10] sm:$0xf]
  %v2191 = vld [vmem:[%s3 + $0x14] sm:$0xf]
  %v2192 = vld [vmem:[%s3 + $0x18] sm:$0xf]
  %v2193 = vld [vmem:[%s3 + $0x1c] sm:$0xf]
  %v2194 = vld [vmem:[%s3 + $0x20] sm:$0xf]
  %v2195 = vld [vmem:[%s3 + $0x24] sm:$0xf]
  %v2196 = vld [vmem:[%s3 + $0x28] sm:$0xf]
  %v2197 = vld [vmem:[%s3 + $0x2c] sm:$0xf]
  %v2198 = vld [vmem:[%s3 + $0x30] sm:$0xf]
  %v2199 = vld [vmem:[%s3 + $0x34] sm:$0xf]
  %v2200 = vld [vmem:[%s3 + $0x38] sm:$0xf]
  %v2201 = vld [vmem:[%s3 + $0x3c] sm:$0xf]
  %v2202 = vld [vmem:[%s3 + $0x40] sm:$0xf]
  %v2203 = vld [vmem:[%s3 + $0x44] sm:$0xf]
  %v2204 = vld [vmem:[%s3 + $0x48] sm:$0xf]
  %v2205 = vld [vmem:[%s3 + $0x4c] sm:$0xf]
  %v2206 = vld [vmem:[%s3 + $0x50] sm:$0xf]
  %v2207 = vld [vmem:[%s3 + $0x54] sm:$0xf]
  %v2208 = vld [vmem:[%s3 + $0x58] sm:$0xf]
  %v2209 = vld [vmem:[%s3 + $0x5c] sm:$0xf]
  %v2210 = vld [vmem:[%s3 + $0x60] sm:$0xf]
  %v2211 = vld [vmem:[%s3 + $0x64] sm:$0xf]
  %v2212 = vld [vmem:[%s3 + $0x68] sm:$0xf]
  %v2213 = vld [vmem:[%s3 + $0x6c] sm:$0xf]
  %v2214 = vld [vmem:[%s3 + $0x70] sm:$0xf]
  %v2215 = vld [vmem:[%s3 + $0x74] sm:$0xf]
  %v2216 = vld [vmem:[%s3 + $0x78] sm:$0xf]
  %v2217 = vld [vmem:[%s3 + $0x7c] sm:$0xf]
  %v2218 = vld [vmem:[%s3 + $0x80] sm:$0xf]
  %v2219 = vld [vmem:[%s3 + $0x84] sm:$0xf]
  %v2220 = vld [vmem:[%s3 + $0x88] sm:$0xf]
  %v2221 = vld [vmem:[%s3 + $0x8c] sm:$0xf]
  %v2222 = vld [vmem:[%s3 + $0x90] sm:$0xf]
  %v2223 = vld [vmem:[%s3 + $0x94] sm:$0xf]
  %v2224 = vld [vmem:[%s3 + $0x98] sm:$0xf]
  %v2225 = vld [vmem:[%s3 + $0x9c] sm:$0xf]
  %v2226 = vld [vmem:[%s3 + $0xa0] sm:$0xf]
  %v2227 = vld [vmem:[%s3 + $0xa4] sm:$0xf]
  %v2228 = vld [vmem:[%s3 + $0xa8] sm:$0xf]
  %v2229 = vld [vmem:[%s3 + $0xac] sm:$0xf]
  %v2230 = vld [vmem:[%s3 + $0xb0] sm:$0xf]
  %v2231 = vld [vmem:[%s3 + $0xb4] sm:$0xf]
  %v2232 = vld [vmem:[%s3 + $0xb8] sm:$0xf]
  %v2233 = vld [vmem:[%s3 + $0xbc] sm:$0xf]
  %v2234 = vld [vmem:[%s3 + $0xc0] sm:$0xf]
  %v2235 = vld [vmem:[%s3 + $0xc4] sm:$0xf]
  %v2236 = vld [vmem:[%s3 + $0xc8] sm:$0xf]
  %v2237 = vld [vmem:[%s3 + $0xcc] sm:$0xf]
  %v2238 = vld [vmem:[%s3 + $0xd0] sm:$0xf]
  %v2239 = vld [vmem:[%s3 + $0xd4] sm:$0xf]
  %v2240 = vld [vmem:[%s3 + $0xd8] sm:$0xf]
  %v2241 = vld [vmem:[%s3 + $0xdc] sm:$0xf]
  %v2242 = vld [vmem:[%s3 + $0xe0] sm:$0xf]
  %v2243 = vld [vmem:[%s3 + $0xe4] sm:$0xf]
  %v2244 = vld [vmem:[%s3 + $0xe8] sm:$0xf]
  %v2245 = vld [vmem:[%s3 + $0xec] sm:$0xf]
  %v2246 = vld [vmem:[%s3 + $0xf0] sm:$0xf]
  %v2247 = vld [vmem:[%s3 + $0xf4] sm:$0xf]
  %v2248 = vld [vmem:[%s3 + $0xf8] sm:$0xf]
  %v2249 = vld [vmem:[%s3 + $0xfc] sm:$0xf]
  %v2250 = vld [vmem:[%s3 + $0x100] sm:$0xf]
  %v2251 = vld [vmem:[%s3 + $0x104] sm:$0xf]
  %v2252 = vld [vmem:[%s3 + $0x108] sm:$0xf]
  %v2253 = vld [vmem:[%s3 + $0x10c] sm:$0xf]
  %v2254 = vld [vmem:[%s3 + $0x110] sm:$0xf]
  %v2255 = vld [vmem:[%s3 + $0x114] sm:$0xf]
  %v2256 = vld [vmem:[%s3 + $0x118] sm:$0xf]
  %v2257 = vld [vmem:[%s3 + $0x11c] sm:$0xf]
  %v2258 = vld [vmem:[%s3 + $0x120] sm:$0xf]
  %v2259 = vld [vmem:[%s3 + $0x124] sm:$0xf]
  %v2260 = vld [vmem:[%s3 + $0x128] sm:$0xf]
  %v2261 = vld [vmem:[%s3 + $0x12c] sm:$0xf]
  %v2262 = vld [vmem:[%s3 + $0x130] sm:$0xf]
  %v2263 = vld [vmem:[%s3 + $0x134] sm:$0xf]
  %v2264 = vld [vmem:[%s3 + $0x138] sm:$0xf]
  %v2265 = vld [vmem:[%s3 + $0x13c] sm:$0xf]
  %v2266 = vld [vmem:[%s3 + $0x140] sm:$0xf]
  %v2267 = vld [vmem:[%s3 + $0x144] sm:$0xf]
  %v2268 = vld [vmem:[%s3 + $0x148] sm:$0xf]
  %v2269 = vld [vmem:[%s3 + $0x14c] sm:$0xf]
  %v2270 = vld [vmem:[%s3 + $0x150] sm:$0xf]
  %v2271 = vld [vmem:[%s3 + $0x154] sm:$0xf]
  %v2272 = vld [vmem:[%s3 + $0x158] sm:$0xf]
  %v2273 = vld [vmem:[%s3 + $0x15c] sm:$0xf]
  %v2274 = vld [vmem:[%s3 + $0x160] sm:$0xf]
  %v2275 = vld [vmem:[%s3 + $0x164] sm:$0xf]
  %v2276 = vld [vmem:[%s3 + $0x168] sm:$0xf]
  %v2277 = vld [vmem:[%s3 + $0x16c] sm:$0xf]
  %v2278 = vld [vmem:[%s3 + $0x170] sm:$0xf]
  %v2279 = vld [vmem:[%s3 + $0x174] sm:$0xf]
  %v2280 = vld [vmem:[%s3 + $0x178] sm:$0xf]
  %v2281 = vld [vmem:[%s3 + $0x17c] sm:$0xf]
  %v2282 = vld [vmem:[%s4] sm:$0x1]
  %v2284 = vlaneseq
  %v2285 = vshrl.u32 %v2284, 7
  %v2286 = vsub.s32 0, %v2285
  %v2287 = vrot.slane %v2282, %v2286
  %v2385 = vunpack.c.l.b16 %v2186
  %v2386 = vunpack.c.l.b16 %v2187
  %v2387 = vunpack.c.l.b16 %v2188
  %v2388 = vunpack.c.l.b16 %v2189
  %v2389 = vunpack.c.l.b16 %v2190
  %v2390 = vunpack.c.l.b16 %v2191
  %v2391 = vunpack.c.l.b16 %v2192
  %v2392 = vunpack.c.l.b16 %v2193
  %v2393 = vunpack.c.l.b16 %v2194
  %v2394 = vunpack.c.l.b16 %v2195
  %v2395 = vunpack.c.l.b16 %v2196
  %v2396 = vunpack.c.l.b16 %v2197
  %v2397 = vunpack.c.l.b16 %v2198
  %v2398 = vunpack.c.l.b16 %v2199
  %v2399 = vunpack.c.l.b16 %v2200
  %v2400 = vunpack.c.l.b16 %v2201
  %v2401 = vunpack.c.l.b16 %v2202
  %v2402 = vunpack.c.l.b16 %v2203
  %v2403 = vunpack.c.l.b16 %v2204
  %v2404 = vunpack.c.l.b16 %v2205
  %v2405 = vunpack.c.l.b16 %v2206
  %v2406 = vunpack.c.l.b16 %v2207
  %v2407 = vunpack.c.l.b16 %v2208
  %v2408 = vunpack.c.l.b16 %v2209
  %v2409 = vunpack.c.l.b16 %v2210
  %v2410 = vunpack.c.l.b16 %v2211
  %v2411 = vunpack.c.l.b16 %v2212
  %v2412 = vunpack.c.l.b16 %v2213
  %v2413 = vunpack.c.l.b16 %v2214
  %v2414 = vunpack.c.l.b16 %v2215
  %v2415 = vunpack.c.l.b16 %v2216
  %v2416 = vunpack.c.l.b16 %v2217
  %v2417 = vunpack.c.l.b16 %v2218
  %v2418 = vunpack.c.l.b16 %v2219
  %v2419 = vunpack.c.l.b16 %v2220
  %v2420 = vunpack.c.l.b16 %v2221
  %v2421 = vunpack.c.l.b16 %v2222
  %v2422 = vunpack.c.l.b16 %v2223
  %v2423 = vunpack.c.l.b16 %v2224
  %v2424 = vunpack.c.l.b16 %v2225
  %v2425 = vunpack.c.l.b16 %v2226
  %v2426 = vunpack.c.l.b16 %v2227
  %v2427 = vunpack.c.l.b16 %v2228
  %v2428 = vunpack.c.l.b16 %v2229
  %v2429 = vunpack.c.l.b16 %v2230
  %v2430 = vunpack.c.l.b16 %v2231
  %v2431 = vunpack.c.l.b16 %v2232
  %v2432 = vunpack.c.l.b16 %v2233
  %v2433 = vunpack.c.l.b16 %v2234
  %v2434 = vunpack.c.l.b16 %v2235
  %v2435 = vunpack.c.l.b16 %v2236
  %v2436 = vunpack.c.l.b16 %v2237
  %v2437 = vunpack.c.l.b16 %v2238
  %v2438 = vunpack.c.l.b16 %v2239
  %v2439 = vunpack.c.l.b16 %v2240
  %v2440 = vunpack.c.l.b16 %v2241
  %v2441 = vunpack.c.l.b16 %v2242
  %v2442 = vunpack.c.l.b16 %v2243
  %v2443 = vunpack.c.l.b16 %v2244
  %v2444 = vunpack.c.l.b16 %v2245
  %v2445 = vunpack.c.l.b16 %v2246
  %v2446 = vunpack.c.l.b16 %v2247
  %v2447 = vunpack.c.l.b16 %v2248
  %v2448 = vunpack.c.l.b16 %v2249
  %v2449 = vunpack.c.l.b16 %v2250
  %v2450 = vunpack.c.l.b16 %v2251
  %v2451 = vunpack.c.l.b16 %v2252
  %v2452 = vunpack.c.l.b16 %v2253
  %v2453 = vunpack.c.l.b16 %v2254
  %v2454 = vunpack.c.l.b16 %v2255
  %v2455 = vunpack.c.l.b16 %v2256
  %v2456 = vunpack.c.l.b16 %v2257
  %v2457 = vunpack.c.l.b16 %v2258
  %v2458 = vunpack.c.l.b16 %v2259
  %v2459 = vunpack.c.l.b16 %v2260
  %v2460 = vunpack.c.l.b16 %v2261
  %v2461 = vunpack.c.l.b16 %v2262
  %v2462 = vunpack.c.l.b16 %v2263
  %v2463 = vunpack.c.l.b16 %v2264
  %v2464 = vunpack.c.l.b16 %v2265
  %v2465 = vunpack.c.l.b16 %v2266
  %v2466 = vunpack.c.l.b16 %v2267
  %v2467 = vunpack.c.l.b16 %v2268
  %v2468 = vunpack.c.l.b16 %v2269
  %v2469 = vunpack.c.l.b16 %v2270
  %v2470 = vunpack.c.l.b16 %v2271
  %v2471 = vunpack.c.l.b16 %v2272
  %v2472 = vunpack.c.l.b16 %v2273
  %v2473 = vunpack.c.l.b16 %v2274
  %v2474 = vunpack.c.l.b16 %v2275
  %v2475 = vunpack.c.l.b16 %v2276
  %v2476 = vunpack.c.l.b16 %v2277
  %v2477 = vunpack.c.l.b16 %v2278
  %v2478 = vunpack.c.l.b16 %v2279
  %v2479 = vunpack.c.l.b16 %v2280
  %v2480 = vunpack.c.l.b16 %v2281
  %v2481 = vpack.c.b16 %v2386, %v2385
  %v2482 = vpack.c.b16 %v2388, %v2387
  %v2483 = vpack.c.b16 %v2390, %v2389
  %v2484 = vpack.c.b16 %v2392, %v2391
  %v2485 = vpack.c.b16 %v2394, %v2393
  %v2486 = vpack.c.b16 %v2396, %v2395
  %v2487 = vpack.c.b16 %v2398, %v2397
  %v2488 = vpack.c.b16 %v2400, %v2399
  %v2489 = vpack.c.b16 %v2402, %v2401
  %v2490 = vpack.c.b16 %v2404, %v2403
  %v2491 = vpack.c.b16 %v2406, %v2405
  %v2492 = vpack.c.b16 %v2408, %v2407
  %v2493 = vpack.c.b16 %v2410, %v2409
  %v2494 = vpack.c.b16 %v2412, %v2411
  %v2495 = vpack.c.b16 %v2414, %v2413
  %v2496 = vpack.c.b16 %v2416, %v2415
  %v2497 = vpack.c.b16 %v2418, %v2417
  %v2498 = vpack.c.b16 %v2420, %v2419
  %v2499 = vpack.c.b16 %v2422, %v2421
  %v2500 = vpack.c.b16 %v2424, %v2423
  %v2501 = vpack.c.b16 %v2426, %v2425
  %v2502 = vpack.c.b16 %v2428, %v2427
  %v2503 = vpack.c.b16 %v2430, %v2429
  %v2504 = vpack.c.b16 %v2432, %v2431
  %v2505 = vpack.c.b16 %v2434, %v2433
  %v2506 = vpack.c.b16 %v2436, %v2435
  %v2507 = vpack.c.b16 %v2438, %v2437
  %v2508 = vpack.c.b16 %v2440, %v2439
  %v2509 = vpack.c.b16 %v2442, %v2441
  %v2510 = vpack.c.b16 %v2444, %v2443
  %v2511 = vpack.c.b16 %v2446, %v2445
  %v2512 = vpack.c.b16 %v2448, %v2447
  %v2513 = vpack.c.b16 %v2450, %v2449
  %v2514 = vpack.c.b16 %v2452, %v2451
  %v2515 = vpack.c.b16 %v2454, %v2453
  %v2516 = vpack.c.b16 %v2456, %v2455
  %v2517 = vpack.c.b16 %v2458, %v2457
  %v2518 = vpack.c.b16 %v2460, %v2459
  %v2519 = vpack.c.b16 %v2462, %v2461
  %v2520 = vpack.c.b16 %v2464, %v2463
  %v2521 = vpack.c.b16 %v2466, %v2465
  %v2522 = vpack.c.b16 %v2468, %v2467
  %v2523 = vpack.c.b16 %v2470, %v2469
  %v2524 = vpack.c.b16 %v2472, %v2471
  %v2525 = vpack.c.b16 %v2474, %v2473
  %v2526 = vpack.c.b16 %v2476, %v2475
  %v2527 = vpack.c.b16 %v2478, %v2477
  %v2528 = vpack.c.b16 %v2480, %v2479
  %2577 = vmatprep.subr.bf16.mxu0 0
  %2578 = vmatpush1.bf16.msra.mxu0 %v2481
  %2579 = vmatprep.subr.bf16.mxu0 0
  %2580 = vmatpush1.bf16.msra.mxu0 %v2482
  %2581 = vmatprep.subr.bf16.mxu0 0
  %2582 = vmatpush1.bf16.msra.mxu0 %v2483
  %2583 = vmatprep.subr.bf16.mxu0 0
  %2584 = vmatpush1.bf16.msra.mxu0 %v2484
  %2585 = vmatprep.subr.bf16.mxu0 0
  %2586 = vmatpush1.bf16.msra.mxu0 %v2485
  %2587 = vmatprep.subr.bf16.mxu0 0
  %2588 = vmatpush1.bf16.msra.mxu0 %v2486
  %2589 = vmatprep.subr.bf16.mxu0 0
  %2590 = vmatpush1.bf16.msra.mxu0 %v2487
  %2591 = vmatprep.subr.bf16.mxu0 0
  %2592 = vmatpush1.bf16.msra.mxu0 %v2488
  %2593 = vmatprep.subr.bf16.mxu0 0
  %2594 = vmatpush1.bf16.msra.mxu0 %v2489
  %2595 = vmatprep.subr.bf16.mxu0 0
  %2596 = vmatpush1.bf16.msra.mxu0 %v2490
  %2597 = vmatprep.subr.bf16.mxu0 0
  %2598 = vmatpush1.bf16.msra.mxu0 %v2491
  %2599 = vmatprep.subr.bf16.mxu0 0
  %2600 = vmatpush1.bf16.msra.mxu0 %v2492
  %2601 = vmatprep.subr.bf16.mxu0 0
  %2602 = vmatpush1.bf16.msra.mxu0 %v2493
  %2603 = vmatprep.subr.bf16.mxu0 0
  %2604 = vmatpush1.bf16.msra.mxu0 %v2494
  %2605 = vmatprep.subr.bf16.mxu0 0
  %2606 = vmatpush1.bf16.msra.mxu0 %v2495
  %2607 = vmatprep.subr.bf16.mxu0 0
  %2608 = vmatpush1.bf16.msra.mxu0 %v2496
  %2609 = vmatprep.mubr.bf16.mxu0 %v2181
  %2610 = vmatmul.mubr.bf16.gmra.mrb[0].mxu0 %v2180
  %v2611 = vpop.f32.mrb[0].mxu0
  %v2612 = vadd.f32 %v2287, %v2611
  %v2613 = vpop.f32.mrb[0].mxu0
  %v2614 = vpop.f32.mrb[0].mxu0
  %v2615 = vpop.f32.mrb[0].mxu0
  %2616 = vdwg.mxu0
  %2617 = vmatprep.subr.bf16.mxu0 0
  %2618 = vmatpush1.bf16.msra.mxu0 %v2497
  %2619 = vmatprep.subr.bf16.mxu0 0
  %2620 = vmatpush1.bf16.msra.mxu0 %v2498
  %2621 = vmatprep.subr.bf16.mxu0 0
  %2622 = vmatpush1.bf16.msra.mxu0 %v2499
  %2623 = vmatprep.subr.bf16.mxu0 0
  %2624 = vmatpush1.bf16.msra.mxu0 %v2500
  %2625 = vmatprep.subr.bf16.mxu0 0
  %2626 = vmatpush1.bf16.msra.mxu0 %v2501
  %2627 = vmatprep.subr.bf16.mxu0 0
  %2628 = vmatpush1.bf16.msra.mxu0 %v2502
  %2629 = vmatprep.subr.bf16.mxu0 0
  %2630 = vmatpush1.bf16.msra.mxu0 %v2503
  %2631 = vmatprep.subr.bf16.mxu0 0
  %2632 = vmatpush1.bf16.msra.mxu0 %v2504
  %2633 = vmatprep.subr.bf16.mxu0 0
  %2634 = vmatpush1.bf16.msra.mxu0 %v2505
  %2635 = vmatprep.subr.bf16.mxu0 0
  %2636 = vmatpush1.bf16.msra.mxu0 %v2506
  %2637 = vmatprep.subr.bf16.mxu0 0
  %2638 = vmatpush1.bf16.msra.mxu0 %v2507
  %2639 = vmatprep.subr.bf16.mxu0 0
  %2640 = vmatpush1.bf16.msra.mxu0 %v2508
  %2641 = vmatprep.subr.bf16.mxu0 0
  %2642 = vmatpush1.bf16.msra.mxu0 %v2509
  %2643 = vmatprep.subr.bf16.mxu0 0
  %2644 = vmatpush1.bf16.msra.mxu0 %v2510
  %2645 = vmatprep.subr.bf16.mxu0 0
  %2646 = vmatpush1.bf16.msra.mxu0 %v2511
  %2647 = vmatprep.subr.bf16.mxu0 0
  %2648 = vmatpush1.bf16.msra.mxu0 %v2512
  %2649 = vmatprep.mubr.bf16.mxu0 %v2183
  %2650 = vmatmul.mubr.bf16.gmra.mrb[0].mxu0 %v2182
  %v2651 = vpop.f32.mrb[0].mxu0
  %v2652 = vadd.f32 %v2612, %v2651
  %v2653 = vpop.f32.mrb[0].mxu0
  %v2654 = vpop.f32.mrb[0].mxu0
  %v2655 = vpop.f32.mrb[0].mxu0
  %2656 = vdwg.mxu0
  %2657 = vmatprep.subr.bf16.mxu0 0
  %2658 = vmatpush1.bf16.msra.mxu0 %v2513
  %2659 = vmatprep.subr.bf16.mxu0 0
  %2660 = vmatpush1.bf16.msra.mxu0 %v2514
  %2661 = vmatprep.subr.bf16.mxu0 0
  %2662 = vmatpush1.bf16.msra.mxu0 %v2515
  %2663 = vmatprep.subr.bf16.mxu0 0
  %2664 = vmatpush1.bf16.msra.mxu0 %v2516
  %2665 = vmatprep.subr.bf16.mxu0 0
  %2666 = vmatpush1.bf16.msra.mxu0 %v2517
  %2667 = vmatprep.subr.bf16.mxu0 0
  %2668 = vmatpush1.bf16.msra.mxu0 %v2518
  %2669 = vmatprep.subr.bf16.mxu0 0
  %2670 = vmatpush1.bf16.msra.mxu0 %v2519
  %2671 = vmatprep.subr.bf16.mxu0 0
  %2672 = vmatpush1.bf16.msra.mxu0 %v2520
  %2673 = vmatprep.subr.bf16.mxu0 0
  %2674 = vmatpush1.bf16.msra.mxu0 %v2521
  %2675 = vmatprep.subr.bf16.mxu0 0
  %2676 = vmatpush1.bf16.msra.mxu0 %v2522
  %2677 = vmatprep.subr.bf16.mxu0 0
  %2678 = vmatpush1.bf16.msra.mxu0 %v2523
  %2679 = vmatprep.subr.bf16.mxu0 0
  %2680 = vmatpush1.bf16.msra.mxu0 %v2524
  %2681 = vmatprep.subr.bf16.mxu0 0
  %2682 = vmatpush1.bf16.msra.mxu0 %v2525
  %2683 = vmatprep.subr.bf16.mxu0 0
  %2684 = vmatpush1.bf16.msra.mxu0 %v2526
  %2685 = vmatprep.subr.bf16.mxu0 0
  %2686 = vmatpush1.bf16.msra.mxu0 %v2527
  %2687 = vmatprep.subr.bf16.mxu0 0
  %2688 = vmatpush1.bf16.msra.mxu0 %v2528
  %2689 = vmatprep.mubr.bf16.mxu0 %v2185
  %2690 = vmatmul.mubr.bf16.gmra.mrb[0].mxu0 %v2184
  %v2691 = vpop.f32.mrb[0].mxu0
  %v2692 = vadd.f32 %v2652, %v2691
  %v2693 = vpop.f32.mrb[0].mxu0
  %v2694 = vpop.f32.mrb[0].mxu0
  %v2695 = vpop.f32.mrb[0].mxu0
  %2696 = vdwg.mxu0
  %v2697 = vlaneseq
  %v2698 = vand.u32 %v2697, 127
  %vm2699 = vcmp.lt.s32.totalorder %v2698, 64
  %vm2700 = vcmp.gt.f32.partialorder %v2692, 20.0
  %v2701 = vmul.f32 %v2692, 1.442695
  %v2702 = vpow.pop %v2701
  %v2703 = vadd.f32 %v2702, 1.0
  %v2704 = vlog2.pop %v2703
  %v2705 = vmul.f32 %v2704, 0.6931472
  %v2706 = vmul.f32 -0.5, %v2702
  %v2707 = vadd.f32 %v2706, 1.0
  %v2708 = vmul.f32 %v2707, %v2702
  %v2709 = vand.u32 2147483647, %v2702
  %vm2710 = vcmp.lt.f32.partialorder %v2709, 0.0004427343
  %v2711 = vsel %vm2710, %v2708, %v2705
  %v2712 = vsel %vm2700, %v2692, %v2711
  %v2713 = vadd.f32 %v2712, 1.0
  %v2714 = vsel %vm2699, %v2692, %v2713
  %2715 = vst [vmem:[%s5] sm:$0xff] %v2714
  // Predicated region
  $region22: #{sentence_pair_classifier_head.1} parent=0 // pred_check
    _
  $region23: #{sentence_pair_classifier_head.1} parent=0 // pred_check_branch
    %2717 = sbr.rel (0) target = $region25
  $region24: #{sentence_pair_classifier_head.1} parent=0 // pred_region
    _
  $region25: #{sentence_pair_classifier_head.1} parent=0 // pred_fallthru
    _
  // Predicated region
  $region26: #{sentence_pair_classifier_head.1} parent=0 // pred_check
    _
  $region27: #{sentence_pair_classifier_head.1} parent=0 // pred_check_branch
    %2719 = sbr.rel (0) target = $region29
  $region28: #{sentence_pair_classifier_head.1} parent=0 // pred_region
    _
  $region29: #{sentence_pair_classifier_head.1} parent=0 // pred_fallthru
    _

</llo_original>
